<compile_context>
chip_gen: v5e
topology: v5e:2x2
jax: 0.10.0
libtpu: 0.0.40
codegen_flags: <defaults>
</compile_context>

<pallas_src>
import jax
import jax.numpy as jnp
from jax.experimental import pallas as pl
from jax.experimental.pallas import tpu as pltpu


def _round_up(v, m):
    return ((v + m - 1) // m) * m


def _edgeconv_node_tile_kernel(feat_ref,   # VMEM [D, tn, Kf]  slot-major, degree-padded CSR features
                               mask_ref,   # VMEM [tn, 1]      1.0 iff node has >=1 incoming edge
                               w1_ref,     # VMEM [Kf, C]      (b1 folded in via ones column)
                               w2_ref,     # VMEM [C, C]
                               b2_ref,     # VMEM [1, C]
                               scale_ref,  # VMEM [1, C]       eval-mode BN affine
                               shift_ref,  # VMEM [1, C]
                               out_ref):   # VMEM [tn, C]
    D, tn, Kf = feat_ref.shape
    C = out_ref.shape[-1]

    # One big MXU matmul: M = D*tn rows, K = Kf, N = C lanes.
    feat = feat_ref[...].reshape(D * tn, Kf)
    h = jnp.dot(feat, w1_ref[...], preferred_element_type=jnp.float32)

    # Mish(h) = h * tanh(softplus(h)) = h * (1 - 2/(u^2 + 2u + 2)),  u = exp(h).
    # Single EUP exp + approx reciprocal; overflow-safe (u=inf -> rcp -> 0 -> factor -> 1).
    u = jnp.exp(h)
    h = h * (1.0 - 2.0 * pl.reciprocal(u * (u + 2.0) + 2.0, approx=True))

    msg = jnp.dot(h.astype(w2_ref.dtype), w2_ref[...],
                  preferred_element_type=jnp.float32) + b2_ref[...]

    # Per-node max over the D slots: vectorized elementwise maxima over static,
    # sublane-aligned slabs (no serial scatter, no -inf init/finalize).
    if D <= 64:
        aggr = msg[0:tn, :]
        for r in range(1, D):
            aggr = jnp.maximum(aggr, msg[r * tn:(r + 1) * tn, :])
    else:
        aggr = jnp.max(msg.reshape(D, tn, C), axis=0)

    # Nodes with no incoming edges aggregate to 0 (PyG max-aggr default), then BN affine.
    aggr = aggr * mask_ref[...]
    out_ref[...] = aggr * scale_ref[...] + shift_ref[...]


def my_nnconv_forward(x, edge_index, edge_attr, params, bn_params, *,
                      target_rows=2048, eps=1e-5, max_degree=None,
                      use_bf16_inputs=False):
    """EdgeConv(Linear -> Mish -> Linear, max aggregation) + eval-mode BatchNorm1d,
    fused into a single Pallas kernel over a fully parallel grid of node tiles."""
    N, in_c = x.shape
    E = edge_index.shape[1]
    out_c = params["w2"].shape[1]

    C = _round_up(max(out_c, 1), 128)          # lane-dense channel padding
    Kf = 2 * in_c + 1                          # [x_i, x_j - x_i, 1]; b1 folded into W1

    # Eval-mode BatchNorm folded to a per-channel affine.
    scale = (bn_params["gamma"] / jnp.sqrt(bn_params["running_var"] + eps)).astype(jnp.float32)
    shift = (bn_params["beta"] - bn_params["running_mean"] * scale).astype(jnp.float32)

    if E == 0:
        # No edges: max aggregation defaults to 0 for every node -> output is the BN shift.
        out = jnp.broadcast_to(shift[None, :], (N, out_c))
        return out, edge_index, edge_attr

    src = edge_index[0].astype(jnp.int32)
    dst = edge_index[1].astype(jnp.int32)

    # ---- dst-sorted, degree-padded CSR (slot-major), built once in the wrapper ----
    deg = jnp.bincount(dst, length=N).astype(jnp.int32)
    if max_degree is None:
        # Static graph assumed: one host sync to size the (static) slot axis.
        D = max(int(jax.device_get(jnp.max(deg))), 1)
    else:
        D = max(int(max_degree), 1)

    order = jnp.argsort(dst)
    src_s = jnp.take(src, order)
    dst_s = jnp.take(dst, order)
    seg_start = jnp.cumsum(deg) - deg                                   # exclusive prefix, [N]

    x_i = jnp.take(x, dst_s, axis=0)
    x_j = jnp.take(x, src_s, axis=0)
    feat_sorted = jnp.concatenate(
        [x_i, x_j - x_i, jnp.ones((E, 1), x.dtype)], axis=1).astype(jnp.float32)   # [E, Kf]

    # Slot r of node n -> r-th incoming edge; extra slots replicate the node's first edge
    # so the max is unaffected (no -inf sentinels anywhere).
    r = jnp.arange(D, dtype=jnp.int32)[:, None]                         # (D, 1)
    e_idx = seg_start[None, :] + jnp.minimum(r, jnp.maximum(deg, 1)[None, :] - 1)
    e_idx = jnp.clip(e_idx, 0, E - 1)                                   # (D, N)
    feat_csr = jnp.take(feat_sorted, e_idx.reshape(-1), axis=0).reshape(D, N, Kf)
    has_edge = (deg > 0)
    feat_csr = jnp.where(has_edge[None, :, None], feat_csr, 0.0)

    # ---- node tiling: pick tn so the MXU M dimension (D*tn) is ~target_rows ----
    tn = max(8, min(_round_up(N, 8), ((target_rows // D) // 8) * 8))
    N_pad = _round_up(N, tn)
    n_tiles = N_pad // tn

    feat_csr = jnp.pad(feat_csr, ((0, 0), (0, N_pad - N), (0, 0)))
    mask = jnp.pad(has_edge.astype(jnp.float32), (0, N_pad - N))[:, None]   # (N_pad, 1)

    # ---- weights: b1 folded into W1; channel axis padded to C lanes ----
    w1 = jnp.concatenate([params["w1"], params["b1"][None, :]], axis=0).astype(jnp.float32)
    w1p = jnp.zeros((Kf, C), jnp.float32).at[:, :out_c].set(w1)
    w2p = jnp.zeros((C, C), jnp.float32).at[:out_c, :out_c].set(params["w2"].astype(jnp.float32))
    b2p = jnp.zeros((1, C), jnp.float32).at[0, :out_c].set(params["b2"].astype(jnp.float32))
    scale_p = jnp.ones((1, C), jnp.float32).at[0, :out_c].set(scale)
    shift_p = jnp.zeros((1, C), jnp.float32).at[0, :out_c].set(shift)

    # Optional bf16 MXU inputs (2x MXU rate on v6e/v7x; halves the HBM edge stream on all gens,
    # incl. v5e).  Mish stays f32 (v5e VPU/EUP have no bf16).  Default off to keep tolerances tight.
    if use_bf16_inputs:
        feat_csr = feat_csr.astype(jnp.bfloat16)
        w1p = w1p.astype(jnp.bfloat16)
        w2p = w2p.astype(jnp.bfloat16)

    grid_spec = pltpu.PrefetchScalarGridSpec(
        num_scalar_prefetch=0,
        grid=(n_tiles,),
        in_specs=[
            # Streamed per-tile edge slots.  (pipeline_mode=pl.Buffered(3) is a further knob
            # if a profile shows exposed DMA at very large tiles.)
            pl.BlockSpec((D, tn, Kf), lambda i: (0, i, 0)),
            pl.BlockSpec((tn, 1), lambda i: (i, 0)),
            # Grid-invariant operands: constant index_map -> stay resident in VMEM.
            pl.BlockSpec((Kf, C), lambda i: (0, 0)),
            pl.BlockSpec((C, C), lambda i: (0, 0)),
            pl.BlockSpec((1, C), lambda i: (0, 0)),
            pl.BlockSpec((1, C), lambda i: (0, 0)),
            pl.BlockSpec((1, C), lambda i: (0, 0)),
        ],
        out_specs=pl.BlockSpec((tn, C), lambda i: (i, 0)),
    )

    # Explicit VMEM budget (v7x: 64 MiB physical / 32 MiB default scoped).
    in_itemsize = 2 if use_bf16_inputs else 4
    rows = D * tn
    vmem_need = (2 * rows * C * in_itemsize        # feat block (lane-padded), double-buffered
                 + 5 * rows * C * 4                # h / u / msg temporaries (f32)
                 + 4 * tn * C * 4                  # out block (double-buffered) + aggr
                 + 2 * (_round_up(Kf, 8) * C + C * C + 3 * 8 * C) * 4
                 + 4 * tn * 128)                   # mask block
    vmem_limit = int(min(48 * 2**20, max(16 * 2**20, 2 * vmem_need)))

    flops = 2 * N_pad * D * Kf * C + 2 * N_pad * D * C * C + 8 * N_pad * D * C
    transcendentals = 2 * N_pad * D * C
    bytes_accessed = (N_pad * D * Kf * in_itemsize + N_pad * C * 4 + N_pad * 4
                      + (Kf * C + C * C + 3 * C) * 4)

    out_pad = pl.pallas_call(
        _edgeconv_node_tile_kernel,
        out_shape=jax.ShapeDtypeStruct((N_pad, C), jnp.float32),
        grid_spec=grid_spec,
        compiler_params=pltpu.CompilerParams(
            # Node tiles are fully independent -> "parallel" lets Mosaic shard the grid
            # across both TensorCores on v7x (single-TC chips ignore it).
            dimension_semantics=("parallel",),
            vmem_limit_bytes=vmem_limit,
        ),
        cost_estimate=pl.CostEstimate(flops=flops,
                                      transcendentals=transcendentals,
                                      bytes_accessed=bytes_accessed),
    )(feat_csr, mask, w1p, w2p, b2p, scale_p, shift_p)

    out = out_pad[:N, :out_c]
    return out, edge_index, edge_attr


def _reference(x, edge_index, params, bn, eps=1e-5):
    """Pure-JAX reference: EdgeConv (max aggregation) + eval-mode BatchNorm1d."""
    N = x.shape[0]
    src, dst = edge_index[0], edge_index[1]
    feat = jnp.concatenate([x[dst], x[src] - x[dst]], axis=1)
    h = jnp.dot(feat, params["w1"]) + params["b1"]
    h = h * jnp.tanh(jax.nn.softplus(h))                       # Mish
    m = jnp.dot(h, params["w2"]) + params["b2"]
    aggr = jax.ops.segment_max(m, dst, num_segments=N)
    aggr = jnp.where(jnp.isneginf(aggr), 0.0, aggr)            # empty nodes -> 0 (PyG default)
    scale = bn["gamma"] / jnp.sqrt(bn["running_var"] + eps)
    return aggr * scale + (bn["beta"] - bn["running_mean"] * scale)


if __name__ == "__main__":
    # Small synthetic graph consistent with myNNConv(in_c, out_c): node features [N, in_c],
    # edge_index [2, E], edge_attr [E, F_edge] (pass-through).  N is not a multiple of 8 so
    # the node-padding / stripping path is exercised too.
    N, E = 60, 512
    in_c, out_c = 4, 8
    F_edge = 4

    key = jax.random.PRNGKey(0)
    ks = jax.random.split(key, 12)

    x = jax.random.normal(ks[0], (N, in_c), jnp.float32)
    src = jax.random.randint(ks[1], (E,), 0, N, dtype=jnp.int32)
    dst = jax.random.randint(ks[2], (E,), 0, N, dtype=jnp.int32)
    edge_index = jnp.stack([src, dst], axis=0)
    edge_attr = jax.random.normal(ks[3], (E, F_edge), jnp.float32)

    # mlp = Linear(2*in_c, out_c) -> Mish -> Linear(out_c, out_c); BatchNorm1d(out_c) eval stats.
    params = {
        "w1": 0.1 * jax.random.normal(ks[4], (2 * in_c, out_c), jnp.float32),
        "b1": 0.1 * jax.random.normal(ks[5], (out_c,), jnp.float32),
        "w2": 0.1 * jax.random.normal(ks[6], (out_c, out_c), jnp.float32),
        "b2": 0.1 * jax.random.normal(ks[7], (out_c,), jnp.float32),
    }
    bn = {
        "gamma": 1.0 + 0.1 * jax.random.normal(ks[8], (out_c,), jnp.float32),
        "beta": 0.1 * jax.random.normal(ks[9], (out_c,), jnp.float32),
        "running_mean": 0.1 * jax.random.normal(ks[10], (out_c,), jnp.float32),
        "running_var": jax.random.uniform(ks[11], (out_c,), jnp.float32, 0.5, 1.5),
    }

    ref = _reference(x, edge_index, params, bn)

    # Default config: one large node tile (MXU M ~= N * max_degree), fully parallel grid.
    out, ei, ea = my_nnconv_forward(x, edge_index, edge_attr, params, bn)
    out = jax.block_until_ready(out)
    assert out.shape == (N, out_c)
    err = float(jnp.max(jnp.abs(out - ref)))
    # Tolerance deliberately 2e-3: kernel uses default MXU precision + approx EUP reciprocal.
    assert jnp.allclose(out, ref, atol=2e-3, rtol=2e-3), f"mismatch (default tiling), max_err={err}"

    # Small node tiles: exercises the multi-tile "parallel" grid / index_map path.
    out2, _, _ = my_nnconv_forward(x, edge_index, edge_attr, params, bn, target_rows=64)
    out2 = jax.block_until_ready(out2)
    err2 = float(jnp.max(jnp.abs(out2 - ref)))
    assert jnp.allclose(out2, ref, atol=2e-3, rtol=2e-3), f"mismatch (tiled), max_err={err2}"

    print("KERNEL_OK")
</pallas_src>

<mosaic_0001>
module attributes {stable_mosaic.version = 11 : i64} {
  func.func @_edgeconv_node_tile_kernel(%arg0: i32, %arg1: memref<15x64x9xf32, #tpu.memory_space<vmem>>, %arg2: memref<64x1xf32, #tpu.memory_space<vmem>>, %arg3: memref<9x128xf32, #tpu.memory_space<vmem>>, %arg4: memref<128x128xf32, #tpu.memory_space<vmem>>, %arg5: memref<1x128xf32, #tpu.memory_space<vmem>>, %arg6: memref<1x128xf32, #tpu.memory_space<vmem>>, %arg7: memref<1x128xf32, #tpu.memory_space<vmem>>, %arg8: memref<64x128xf32, #tpu.memory_space<vmem>>) attributes {dimension_semantics = [#tpu.dimension_semantics<parallel>], iteration_bounds = array<i64: 1>, scalar_prefetch = 0 : i64, scratch_operands = 0 : i64, tpu.core_type = #tpu.core_type<tc>, window_params = [{transform_indices = @transform_0, window_bounds = array<i64: 15, 64, 9>}, {transform_indices = @transform_1, window_bounds = array<i64: 64, 1>}, {pipeline_mode = #tpu.pipeline_mode<synchronous>, transform_indices = @transform_2, window_bounds = array<i64: 9, 128>}, {pipeline_mode = #tpu.pipeline_mode<synchronous>, transform_indices = @transform_3, window_bounds = array<i64: 128, 128>}, {pipeline_mode = #tpu.pipeline_mode<synchronous>, transform_indices = @transform_4, window_bounds = array<i64: 1, 128>}, {pipeline_mode = #tpu.pipeline_mode<synchronous>, transform_indices = @transform_5, window_bounds = array<i64: 1, 128>}, {pipeline_mode = #tpu.pipeline_mode<synchronous>, transform_indices = @transform_6, window_bounds = array<i64: 1, 128>}, {transform_indices = @transform_7, window_bounds = array<i64: 64, 128>}]} {
    %c0 = arith.constant 0 : index
    %c0_0 = arith.constant 0 : index
    %c0_1 = arith.constant 0 : index
    %0 = vector.load %arg1[%c0, %c0_0, %c0_1] : memref<15x64x9xf32, #tpu.memory_space<vmem>>, vector<15x64x9xf32>
    %1 = vector.shape_cast %0 : vector<15x64x9xf32> to vector<960x9xf32>
    %c0_2 = arith.constant 0 : index
    %c0_3 = arith.constant 0 : index
    %2 = vector.load %arg3[%c0_2, %c0_3] : memref<9x128xf32, #tpu.memory_space<vmem>>, vector<9x128xf32>
    %cst = arith.constant dense<0.000000e+00> : vector<960x128xf32>
    %3 = tpu.matmul %1, %2, %cst {dimension_numbers = #tpu.dot_dimension_numbers<[1], [0], [0], [1], [0, 0, 1, 1], [], []>} : vector<960x9xf32>, vector<9x128xf32>, vector<960x128xf32> -> vector<960x128xf32>
    %4 = math.exp %3 : vector<960x128xf32>
    %cst_4 = arith.constant 2.000000e+00 : f32
    %5 = vector.broadcast %cst_4 : f32 to vector<960x128xf32>
    %6 = arith.addf %4, %5 : vector<960x128xf32>
    %7 = arith.mulf %4, %6 : vector<960x128xf32>
    %cst_5 = arith.constant 2.000000e+00 : f32
    %8 = vector.broadcast %cst_5 : f32 to vector<960x128xf32>
    %9 = arith.addf %7, %8 : vector<960x128xf32>
    %10 = tpu.reciprocal %9 {approx = true} : vector<960x128xf32> -> vector<960x128xf32>
    %cst_6 = arith.constant 2.000000e+00 : f32
    %11 = vector.broadcast %cst_6 : f32 to vector<960x128xf32>
    %12 = arith.mulf %11, %10 : vector<960x128xf32>
    %cst_7 = arith.constant 1.000000e+00 : f32
    %13 = vector.broadcast %cst_7 : f32 to vector<960x128xf32>
    %14 = arith.subf %13, %12 : vector<960x128xf32>
    %15 = arith.mulf %3, %14 : vector<960x128xf32>
    %c0_8 = arith.constant 0 : index
    %c0_9 = arith.constant 0 : index
    %16 = vector.load %arg4[%c0_8, %c0_9] : memref<128x128xf32, #tpu.memory_space<vmem>>, vector<128x128xf32>
    %cst_10 = arith.constant dense<0.000000e+00> : vector<960x128xf32>
    %17 = tpu.matmul %15, %16, %cst_10 {dimension_numbers = #tpu.dot_dimension_numbers<[1], [0], [0], [1], [0, 0, 1, 1], [], []>} : vector<960x128xf32>, vector<128x128xf32>, vector<960x128xf32> -> vector<960x128xf32>
    %c0_11 = arith.constant 0 : index
    %c0_12 = arith.constant 0 : index
    %18 = vector.load %arg5[%c0_11, %c0_12] : memref<1x128xf32, #tpu.memory_space<vmem>>, vector<1x128xf32>
    %19 = vector.broadcast %18 : vector<1x128xf32> to vector<960x128xf32>
    %20 = arith.addf %17, %19 : vector<960x128xf32>
    %21 = vector.extract_strided_slice %20 {offsets = [0, 0], sizes = [64, 128], strides = [1, 1]} : vector<960x128xf32> to vector<64x128xf32>
    %22 = vector.extract_strided_slice %20 {offsets = [64, 0], sizes = [64, 128], strides = [1, 1]} : vector<960x128xf32> to vector<64x128xf32>
    %23 = arith.maximumf %21, %22 : vector<64x128xf32>
    %24 = vector.extract_strided_slice %20 {offsets = [128, 0], sizes = [64, 128], strides = [1, 1]} : vector<960x128xf32> to vector<64x128xf32>
    %25 = arith.maximumf %23, %24 : vector<64x128xf32>
    %26 = vector.extract_strided_slice %20 {offsets = [192, 0], sizes = [64, 128], strides = [1, 1]} : vector<960x128xf32> to vector<64x128xf32>
    %27 = arith.maximumf %25, %26 : vector<64x128xf32>
    %28 = vector.extract_strided_slice %20 {offsets = [256, 0], sizes = [64, 128], strides = [1, 1]} : vector<960x128xf32> to vector<64x128xf32>
    %29 = arith.maximumf %27, %28 : vector<64x128xf32>
    %30 = vector.extract_strided_slice %20 {offsets = [320, 0], sizes = [64, 128], strides = [1, 1]} : vector<960x128xf32> to vector<64x128xf32>
    %31 = arith.maximumf %29, %30 : vector<64x128xf32>
    %32 = vector.extract_strided_slice %20 {offsets = [384, 0], sizes = [64, 128], strides = [1, 1]} : vector<960x128xf32> to vector<64x128xf32>
    %33 = arith.maximumf %31, %32 : vector<64x128xf32>
    %34 = vector.extract_strided_slice %20 {offsets = [448, 0], sizes = [64, 128], strides = [1, 1]} : vector<960x128xf32> to vector<64x128xf32>
    %35 = arith.maximumf %33, %34 : vector<64x128xf32>
    %36 = vector.extract_strided_slice %20 {offsets = [512, 0], sizes = [64, 128], strides = [1, 1]} : vector<960x128xf32> to vector<64x128xf32>
    %37 = arith.maximumf %35, %36 : vector<64x128xf32>
    %38 = vector.extract_strided_slice %20 {offsets = [576, 0], sizes = [64, 128], strides = [1, 1]} : vector<960x128xf32> to vector<64x128xf32>
    %39 = arith.maximumf %37, %38 : vector<64x128xf32>
    %40 = vector.extract_strided_slice %20 {offsets = [640, 0], sizes = [64, 128], strides = [1, 1]} : vector<960x128xf32> to vector<64x128xf32>
    %41 = arith.maximumf %39, %40 : vector<64x128xf32>
    %42 = vector.extract_strided_slice %20 {offsets = [704, 0], sizes = [64, 128], strides = [1, 1]} : vector<960x128xf32> to vector<64x128xf32>
    %43 = arith.maximumf %41, %42 : vector<64x128xf32>
    %44 = vector.extract_strided_slice %20 {offsets = [768, 0], sizes = [64, 128], strides = [1, 1]} : vector<960x128xf32> to vector<64x128xf32>
    %45 = arith.maximumf %43, %44 : vector<64x128xf32>
    %46 = vector.extract_strided_slice %20 {offsets = [832, 0], sizes = [64, 128], strides = [1, 1]} : vector<960x128xf32> to vector<64x128xf32>
    %47 = arith.maximumf %45, %46 : vector<64x128xf32>
    %48 = vector.extract_strided_slice %20 {offsets = [896, 0], sizes = [64, 128], strides = [1, 1]} : vector<960x128xf32> to vector<64x128xf32>
    %49 = arith.maximumf %47, %48 : vector<64x128xf32>
    %c0_13 = arith.constant 0 : index
    %c0_14 = arith.constant 0 : index
    %50 = vector.load %arg2[%c0_13, %c0_14] : memref<64x1xf32, #tpu.memory_space<vmem>>, vector<64x1xf32>
    %51 = vector.broadcast %50 : vector<64x1xf32> to vector<64x128xf32>
    %52 = arith.mulf %49, %51 : vector<64x128xf32>
    %c0_15 = arith.constant 0 : index
    %c0_16 = arith.constant 0 : index
    %53 = vector.load %arg6[%c0_15, %c0_16] : memref<1x128xf32, #tpu.memory_space<vmem>>, vector<1x128xf32>
    %54 = vector.broadcast %53 : vector<1x128xf32> to vector<64x128xf32>
    %55 = arith.mulf %52, %54 : vector<64x128xf32>
    %c0_17 = arith.constant 0 : index
    %c0_18 = arith.constant 0 : index
    %56 = vector.load %arg7[%c0_17, %c0_18] : memref<1x128xf32, #tpu.memory_space<vmem>>, vector<1x128xf32>
    %57 = vector.broadcast %56 : vector<1x128xf32> to vector<64x128xf32>
    %58 = arith.addf %55, %57 : vector<64x128xf32>
    %c0_19 = arith.constant 0 : index
    %c0_20 = arith.constant 0 : index
    %59 = vector.load %arg8[%c0_19, %c0_20] : memref<64x128xf32, #tpu.memory_space<vmem>>, vector<64x128xf32>
    tpu.vector_store %arg8[%c0_19, %c0_20], %58 {strides = array<i32>} : memref<64x128xf32, #tpu.memory_space<vmem>>, vector<64x128xf32>,
    return
  }
  func.func @transform_0(%arg0: i32) -> (i32, i32, i32) {
    %c0_i32 = arith.constant 0 : i32
    %c0_i32_0 = arith.constant 0 : i32
    %c0_i32_1 = arith.constant 0 : i32
    return %c0_i32, %arg0, %c0_i32_0 : i32, i32, i32
  }
  func.func @transform_1(%arg0: i32) -> (i32, i32) {
    %c0_i32 = arith.constant 0 : i32
    %c0_i32_0 = arith.constant 0 : i32
    return %arg0, %c0_i32 : i32, i32
  }
  func.func @transform_2(%arg0: i32) -> (i32, i32) {
    %c0_i32 = arith.constant 0 : i32
    %c0_i32_0 = arith.constant 0 : i32
    %c0_i32_1 = arith.constant 0 : i32
    return %c0_i32, %c0_i32_0 : i32, i32
  }
  func.func @transform_3(%arg0: i32) -> (i32, i32) {
    %c0_i32 = arith.constant 0 : i32
    %c0_i32_0 = arith.constant 0 : i32
    %c0_i32_1 = arith.constant 0 : i32
    return %c0_i32, %c0_i32_0 : i32, i32
  }
  func.func @transform_4(%arg0: i32) -> (i32, i32) {
    %c0_i32 = arith.constant 0 : i32
    %c0_i32_0 = arith.constant 0 : i32
    %c0_i32_1 = arith.constant 0 : i32
    return %c0_i32, %c0_i32_0 : i32, i32
  }
  func.func @transform_5(%arg0: i32) -> (i32, i32) {
    %c0_i32 = arith.constant 0 : i32
    %c0_i32_0 = arith.constant 0 : i32
    %c0_i32_1 = arith.constant 0 : i32
    return %c0_i32, %c0_i32_0 : i32, i32
  }
  func.func @transform_6(%arg0: i32) -> (i32, i32) {
    %c0_i32 = arith.constant 0 : i32
    %c0_i32_0 = arith.constant 0 : i32
    %c0_i32_1 = arith.constant 0 : i32
    return %c0_i32, %c0_i32_0 : i32, i32
  }
  func.func @transform_7(%arg0: i32) -> (i32, i32) {
    %c0_i32 = arith.constant 0 : i32
    %c0_i32_0 = arith.constant 0 : i32
    return %arg0, %c0_i32 : i32, i32
  }
}

</mosaic_0001>

<llo_original>
// kernel: tpu_custom_call.1
$region0: #{tpu_custom_call.1}
  #allocation0 [shape = 'u32[]', space=smem, size = 0x4, offset = 0x4, fixed_abs, tag = 'smem constant byte address 0x4 - core index']
  #allocation1 [shape = 'u32[72,128]{1,0:T(1,128)}', space=vmem, size = 0x9000, scoped, tag = 'internal scratch']
  %s0 = inlined_call_operand.vmem [shape: f32[15,64,9], index: 0, kind: input, shape index: {}]
  %s1 = inlined_call_operand.vmem [shape: f32[64,1], index: 1, kind: input, shape index: {}]
  %s2 = inlined_call_operand.vmem [shape: f32[9,128], index: 2, kind: input, shape index: {}]
  %s3 = inlined_call_operand.vmem [shape: f32[128,128], index: 3, kind: input, shape index: {}]
  %s4 = inlined_call_operand.vmem [shape: f32[1,128], index: 4, kind: input, shape index: {}]
  %s5 = inlined_call_operand.vmem [shape: f32[1,128], index: 5, kind: input, shape index: {}]
  %s6 = inlined_call_operand.vmem [shape: f32[1,128], index: 6, kind: input, shape index: {}]
  %s7 = inlined_call_operand.hbm [shape: f32[64,128], index: 7, kind: output, shape index: {}]
  %s8 = sld [smem:[#allocation0]]
  $region38: #{tpu_custom_call.1} parent=0
    _
  %s10 = ssub.s32 1, %s8
  %s11 = scalar_select 0, %s10, %s8
  $region1: #{tpu_custom_call.1} parent=0
    #allocation2 [shape = 'u8[32768]{0}', space=vmem, size = 0x8000, scoped, tag = 'output window, operand 0, single buffered']
    #allocation3 [shape = 's32[1]{0}', space=sflag, size = 0x4, scoped, tag = 'scoped memory for tpu_custom_call.1']
    %12 = vsyncpa [#allocation3], 0
    // Predicated region
    $region2: #{tpu_custom_call.1} parent=1 // pred_check
      _
    $region3: #{tpu_custom_call.1} parent=1 // pred_check_branch
      %14 = sbr.rel (0) target = $region5
    $region4: #{tpu_custom_call.1} parent=1 // pred_region
      _
    $region5: #{tpu_custom_call.1} parent=1 // pred_fallthru
      _
    // Predicated region
    $region6: #{tpu_custom_call.1} parent=1 // pred_check
      _
    $region7: #{tpu_custom_call.1} parent=1 // pred_check_branch
      %16 = sbr.rel (0) target = $region9
    $region8: #{tpu_custom_call.1} parent=1 // pred_region
      _
    $region9: #{tpu_custom_call.1} parent=1 // pred_fallthru
      _
    // Predicated region
    $region10: #{tpu_custom_call.1} parent=1 // pred_check
      _
    $region11: #{tpu_custom_call.1} parent=1 // pred_check_branch
      %18 = sbr.rel (0) target = $region13
    $region12: #{tpu_custom_call.1} parent=1 // pred_region
      _
    $region13: #{tpu_custom_call.1} parent=1 // pred_fallthru
      _
    // Predicated region
    $region14: #{tpu_custom_call.1} parent=1 // pred_check
      _
    $region15: #{tpu_custom_call.1} parent=1 // pred_check_branch
      %20 = sbr.rel (0) target = $region17
    $region16: #{tpu_custom_call.1} parent=1 // pred_region
      _
    $region17: #{tpu_custom_call.1} parent=1 // pred_fallthru
      _
    // Predicated region
    $region18: #{tpu_custom_call.1} parent=1 // pred_check
      _
    $region19: #{tpu_custom_call.1} parent=1 // pred_check_branch
      %22 = sbr.rel (0) target = $region21
    $region20: #{tpu_custom_call.1} parent=1 // pred_region
      _
    $region21: #{tpu_custom_call.1} parent=1 // pred_fallthru
      _
    // Predicated region
    $region22: #{tpu_custom_call.1} parent=1 // pred_check
      _
    $region23: #{tpu_custom_call.1} parent=1 // pred_check_branch
      %24 = sbr.rel (0) target = $region25
    $region24: #{tpu_custom_call.1} parent=1 // pred_region
      _
    $region25: #{tpu_custom_call.1} parent=1 // pred_fallthru
      _
    // Predicated region
    $region26: #{tpu_custom_call.1} parent=1 // pred_check
      _
    $region27: #{tpu_custom_call.1} parent=1 // pred_check_branch
      %26 = sbr.rel (0) target = $region29
    $region28: #{tpu_custom_call.1} parent=1 // pred_region
      _
    $region29: #{tpu_custom_call.1} parent=1 // pred_fallthru
      _
    %v27 = vld [vmem:[%s0] sm:$0xff]
    %v28 = vld [vmem:[%s0 + $0x8] sm:$0xff]
    %v29 = vld [vmem:[%s0 + $0x10] sm:$0xff]
    %v30 = vld [vmem:[%s0 + $0x18] sm:$0xff]
    %v31 = vld [vmem:[%s0 + $0x20] sm:$0xff]
    %v32 = vld [vmem:[%s0 + $0x28] sm:$0xff]
    %v33 = vld [vmem:[%s0 + $0x30] sm:$0xff]
    %v34 = vld [vmem:[%s0 + $0x38] sm:$0xff]
    %v35 = vld [vmem:[%s0 + $0x40] sm:$0xff]
    %v36 = vld [vmem:[%s0 + $0x48] sm:$0xff]
    %v37 = vld [vmem:[%s0 + $0x50] sm:$0xff]
    %v38 = vld [vmem:[%s0 + $0x58] sm:$0xff]
    %v39 = vld [vmem:[%s0 + $0x60] sm:$0xff]
    %v40 = vld [vmem:[%s0 + $0x68] sm:$0xff]
    %v41 = vld [vmem:[%s0 + $0x70] sm:$0xff]
    %v42 = vld [vmem:[%s0 + $0x78] sm:$0xff]
    %v43 = vld [vmem:[%s0 + $0x80] sm:$0xff]
    %v44 = vld [vmem:[%s0 + $0x88] sm:$0xff]
    %v45 = vld [vmem:[%s0 + $0x90] sm:$0xff]
    %v46 = vld [vmem:[%s0 + $0x98] sm:$0xff]
    %v47 = vld [vmem:[%s0 + $0xa0] sm:$0xff]
    %v48 = vld [vmem:[%s0 + $0xa8] sm:$0xff]
    %v49 = vld [vmem:[%s0 + $0xb0] sm:$0xff]
    %v50 = vld [vmem:[%s0 + $0xb8] sm:$0xff]
    %v51 = vld [vmem:[%s0 + $0xc0] sm:$0xff]
    %v52 = vld [vmem:[%s0 + $0xc8] sm:$0xff]
    %v53 = vld [vmem:[%s0 + $0xd0] sm:$0xff]
    %v54 = vld [vmem:[%s0 + $0xd8] sm:$0xff]
    %v55 = vld [vmem:[%s0 + $0xe0] sm:$0xff]
    %v56 = vld [vmem:[%s0 + $0xe8] sm:$0xff]
    %v57 = vld [vmem:[%s0 + $0xf0] sm:$0xff]
    %v58 = vld [vmem:[%s0 + $0xf8] sm:$0xff]
    %v59 = vld [vmem:[%s0 + $0x100] sm:$0xff]
    %v60 = vld [vmem:[%s0 + $0x108] sm:$0xff]
    %v61 = vld [vmem:[%s0 + $0x110] sm:$0xff]
    %v62 = vld [vmem:[%s0 + $0x118] sm:$0xff]
    %v63 = vld [vmem:[%s0 + $0x120] sm:$0xff]
    %v64 = vld [vmem:[%s0 + $0x128] sm:$0xff]
    %v65 = vld [vmem:[%s0 + $0x130] sm:$0xff]
    %v66 = vld [vmem:[%s0 + $0x138] sm:$0xff]
    %v67 = vld [vmem:[%s0 + $0x140] sm:$0xff]
    %v68 = vld [vmem:[%s0 + $0x148] sm:$0xff]
    %v69 = vld [vmem:[%s0 + $0x150] sm:$0xff]
    %v70 = vld [vmem:[%s0 + $0x158] sm:$0xff]
    %v71 = vld [vmem:[%s0 + $0x160] sm:$0xff]
    %v72 = vld [vmem:[%s0 + $0x168] sm:$0xff]
    %v73 = vld [vmem:[%s0 + $0x170] sm:$0xff]
    %v74 = vld [vmem:[%s0 + $0x178] sm:$0xff]
    %v75 = vld [vmem:[%s0 + $0x180] sm:$0xff]
    %v76 = vld [vmem:[%s0 + $0x188] sm:$0xff]
    %v77 = vld [vmem:[%s0 + $0x190] sm:$0xff]
    %v78 = vld [vmem:[%s0 + $0x198] sm:$0xff]
    %v79 = vld [vmem:[%s0 + $0x1a0] sm:$0xff]
    %v80 = vld [vmem:[%s0 + $0x1a8] sm:$0xff]
    %v81 = vld [vmem:[%s0 + $0x1b0] sm:$0xff]
    %v82 = vld [vmem:[%s0 + $0x1b8] sm:$0xff]
    %v83 = vld [vmem:[%s0 + $0x1c0] sm:$0xff]
    %v84 = vld [vmem:[%s0 + $0x1c8] sm:$0xff]
    %v85 = vld [vmem:[%s0 + $0x1d0] sm:$0xff]
    %v86 = vld [vmem:[%s0 + $0x1d8] sm:$0xff]
    %v87 = vld [vmem:[%s0 + $0x1e0] sm:$0xff]
    %v88 = vld [vmem:[%s0 + $0x1e8] sm:$0xff]
    %v89 = vld [vmem:[%s0 + $0x1f0] sm:$0xff]
    %v90 = vld [vmem:[%s0 + $0x1f8] sm:$0xff]
    %v91 = vld [vmem:[%s0 + $0x200] sm:$0xff]
    %v92 = vld [vmem:[%s0 + $0x208] sm:$0xff]
    %v93 = vld [vmem:[%s0 + $0x210] sm:$0xff]
    %v94 = vld [vmem:[%s0 + $0x218] sm:$0xff]
    %v95 = vld [vmem:[%s0 + $0x220] sm:$0xff]
    %v96 = vld [vmem:[%s0 + $0x228] sm:$0xff]
    %v97 = vld [vmem:[%s0 + $0x230] sm:$0xff]
    %v98 = vld [vmem:[%s0 + $0x238] sm:$0xff]
    %v99 = vld [vmem:[%s0 + $0x240] sm:$0xff]
    %v100 = vld [vmem:[%s0 + $0x248] sm:$0xff]
    %v101 = vld [vmem:[%s0 + $0x250] sm:$0xff]
    %v102 = vld [vmem:[%s0 + $0x258] sm:$0xff]
    %v103 = vld [vmem:[%s0 + $0x260] sm:$0xff]
    %v104 = vld [vmem:[%s0 + $0x268] sm:$0xff]
    %v105 = vld [vmem:[%s0 + $0x270] sm:$0xff]
    %v106 = vld [vmem:[%s0 + $0x278] sm:$0xff]
    %v107 = vld [vmem:[%s0 + $0x280] sm:$0xff]
    %v108 = vld [vmem:[%s0 + $0x288] sm:$0xff]
    %v109 = vld [vmem:[%s0 + $0x290] sm:$0xff]
    %v110 = vld [vmem:[%s0 + $0x298] sm:$0xff]
    %v111 = vld [vmem:[%s0 + $0x2a0] sm:$0xff]
    %v112 = vld [vmem:[%s0 + $0x2a8] sm:$0xff]
    %v113 = vld [vmem:[%s0 + $0x2b0] sm:$0xff]
    %v114 = vld [vmem:[%s0 + $0x2b8] sm:$0xff]
    %v115 = vld [vmem:[%s0 + $0x2c0] sm:$0xff]
    %v116 = vld [vmem:[%s0 + $0x2c8] sm:$0xff]
    %v117 = vld [vmem:[%s0 + $0x2d0] sm:$0xff]
    %v118 = vld [vmem:[%s0 + $0x2d8] sm:$0xff]
    %v119 = vld [vmem:[%s0 + $0x2e0] sm:$0xff]
    %v120 = vld [vmem:[%s0 + $0x2e8] sm:$0xff]
    %v121 = vld [vmem:[%s0 + $0x2f0] sm:$0xff]
    %v122 = vld [vmem:[%s0 + $0x2f8] sm:$0xff]
    %v123 = vld [vmem:[%s0 + $0x300] sm:$0xff]
    %v124 = vld [vmem:[%s0 + $0x308] sm:$0xff]
    %v125 = vld [vmem:[%s0 + $0x310] sm:$0xff]
    %v126 = vld [vmem:[%s0 + $0x318] sm:$0xff]
    %v127 = vld [vmem:[%s0 + $0x320] sm:$0xff]
    %v128 = vld [vmem:[%s0 + $0x328] sm:$0xff]
    %v129 = vld [vmem:[%s0 + $0x330] sm:$0xff]
    %v130 = vld [vmem:[%s0 + $0x338] sm:$0xff]
    %v131 = vld [vmem:[%s0 + $0x340] sm:$0xff]
    %v132 = vld [vmem:[%s0 + $0x348] sm:$0xff]
    %v133 = vld [vmem:[%s0 + $0x350] sm:$0xff]
    %v134 = vld [vmem:[%s0 + $0x358] sm:$0xff]
    %v135 = vld [vmem:[%s0 + $0x360] sm:$0xff]
    %v136 = vld [vmem:[%s0 + $0x368] sm:$0xff]
    %v137 = vld [vmem:[%s0 + $0x370] sm:$0xff]
    %v138 = vld [vmem:[%s0 + $0x378] sm:$0xff]
    %v139 = vld [vmem:[%s0 + $0x380] sm:$0xff]
    %v140 = vld [vmem:[%s0 + $0x388] sm:$0xff]
    %v141 = vld [vmem:[%s0 + $0x390] sm:$0xff]
    %v142 = vld [vmem:[%s0 + $0x398] sm:$0xff]
    %v143 = vld [vmem:[%s0 + $0x3a0] sm:$0xff]
    %v144 = vld [vmem:[%s0 + $0x3a8] sm:$0xff]
    %v145 = vld [vmem:[%s0 + $0x3b0] sm:$0xff]
    %v146 = vld [vmem:[%s0 + $0x3b8] sm:$0xff]
    %v147 = vld [vmem:[%s2] sm:$0xff]
    %v148 = vld [vmem:[%s2 + $0x8] sm:$0x1]
    %vm149 = vcmask 72704
    %v151 = vsel %vm149, %v27, 0
    %v154 = vsel %vm149, %v28, 0
    %v157 = vsel %vm149, %v29, 0
    %v160 = vsel %vm149, %v30, 0
    %v163 = vsel %vm149, %v31, 0
    %v166 = vsel %vm149, %v32, 0
    %v169 = vsel %vm149, %v33, 0
    %v172 = vsel %vm149, %v34, 0
    %v175 = vsel %vm149, %v35, 0
    %v178 = vsel %vm149, %v36, 0
    %v181 = vsel %vm149, %v37, 0
    %v184 = vsel %vm149, %v38, 0
    %v187 = vsel %vm149, %v39, 0
    %v190 = vsel %vm149, %v40, 0
    %v193 = vsel %vm149, %v41, 0
    %v196 = vsel %vm149, %v42, 0
    %v199 = vsel %vm149, %v43, 0
    %v202 = vsel %vm149, %v44, 0
    %v205 = vsel %vm149, %v45, 0
    %v208 = vsel %vm149, %v46, 0
    %v211 = vsel %vm149, %v47, 0
    %v214 = vsel %vm149, %v48, 0
    %v217 = vsel %vm149, %v49, 0
    %v220 = vsel %vm149, %v50, 0
    %v223 = vsel %vm149, %v51, 0
    %v226 = vsel %vm149, %v52, 0
    %v229 = vsel %vm149, %v53, 0
    %v232 = vsel %vm149, %v54, 0
    %v235 = vsel %vm149, %v55, 0
    %v238 = vsel %vm149, %v56, 0
    %v241 = vsel %vm149, %v57, 0
    %v244 = vsel %vm149, %v58, 0
    %v247 = vsel %vm149, %v59, 0
    %v250 = vsel %vm149, %v60, 0
    %v253 = vsel %vm149, %v61, 0
    %v256 = vsel %vm149, %v62, 0
    %v259 = vsel %vm149, %v63, 0
    %v262 = vsel %vm149, %v64, 0
    %v265 = vsel %vm149, %v65, 0
    %v268 = vsel %vm149, %v66, 0
    %v271 = vsel %vm149, %v67, 0
    %v274 = vsel %vm149, %v68, 0
    %v277 = vsel %vm149, %v69, 0
    %v280 = vsel %vm149, %v70, 0
    %v283 = vsel %vm149, %v71, 0
    %v286 = vsel %vm149, %v72, 0
    %v289 = vsel %vm149, %v73, 0
    %v292 = vsel %vm149, %v74, 0
    %v295 = vsel %vm149, %v75, 0
    %v298 = vsel %vm149, %v76, 0
    %v301 = vsel %vm149, %v77, 0
    %v304 = vsel %vm149, %v78, 0
    %v307 = vsel %vm149, %v79, 0
    %v310 = vsel %vm149, %v80, 0
    %v313 = vsel %vm149, %v81, 0
    %v316 = vsel %vm149, %v82, 0
    %v319 = vsel %vm149, %v83, 0
    %v322 = vsel %vm149, %v84, 0
    %v325 = vsel %vm149, %v85, 0
    %v328 = vsel %vm149, %v86, 0
    %v331 = vsel %vm149, %v87, 0
    %v334 = vsel %vm149, %v88, 0
    %v337 = vsel %vm149, %v89, 0
    %v340 = vsel %vm149, %v90, 0
    %v343 = vsel %vm149, %v91, 0
    %v346 = vsel %vm149, %v92, 0
    %v349 = vsel %vm149, %v93, 0
    %v352 = vsel %vm149, %v94, 0
    %v355 = vsel %vm149, %v95, 0
    %v358 = vsel %vm149, %v96, 0
    %v361 = vsel %vm149, %v97, 0
    %v364 = vsel %vm149, %v98, 0
    %v367 = vsel %vm149, %v99, 0
    %v370 = vsel %vm149, %v100, 0
    %v373 = vsel %vm149, %v101, 0
    %v376 = vsel %vm149, %v102, 0
    %v379 = vsel %vm149, %v103, 0
    %v382 = vsel %vm149, %v104, 0
    %v385 = vsel %vm149, %v105, 0
    %v388 = vsel %vm149, %v106, 0
    %v391 = vsel %vm149, %v107, 0
    %v394 = vsel %vm149, %v108, 0
    %v397 = vsel %vm149, %v109, 0
    %v400 = vsel %vm149, %v110, 0
    %v403 = vsel %vm149, %v111, 0
    %v406 = vsel %vm149, %v112, 0
    %v409 = vsel %vm149, %v113, 0
    %v412 = vsel %vm149, %v114, 0
    %v415 = vsel %vm149, %v115, 0
    %v418 = vsel %vm149, %v116, 0
    %v421 = vsel %vm149, %v117, 0
    %v424 = vsel %vm149, %v118, 0
    %v427 = vsel %vm149, %v119, 0
    %v430 = vsel %vm149, %v120, 0
    %v433 = vsel %vm149, %v121, 0
    %v436 = vsel %vm149, %v122, 0
    %v439 = vsel %vm149, %v123, 0
    %v442 = vsel %vm149, %v124, 0
    %v445 = vsel %vm149, %v125, 0
    %v448 = vsel %vm149, %v126, 0
    %v451 = vsel %vm149, %v127, 0
    %v454 = vsel %vm149, %v128, 0
    %v457 = vsel %vm149, %v129, 0
    %v460 = vsel %vm149, %v130, 0
    %v463 = vsel %vm149, %v131, 0
    %v466 = vsel %vm149, %v132, 0
    %v469 = vsel %vm149, %v133, 0
    %v472 = vsel %vm149, %v134, 0
    %v475 = vsel %vm149, %v135, 0
    %v478 = vsel %vm149, %v136, 0
    %v481 = vsel %vm149, %v137, 0
    %v484 = vsel %vm149, %v138, 0
    %v487 = vsel %vm149, %v139, 0
    %v490 = vsel %vm149, %v140, 0
    %v493 = vsel %vm149, %v141, 0
    %v496 = vsel %vm149, %v142, 0
    %v499 = vsel %vm149, %v143, 0
    %v502 = vsel %vm149, %v144, 0
    %v505 = vsel %vm149, %v145, 0
    %v508 = vsel %vm149, %v146, 0
    %vm510 = vcmask 1040384
    %v512 = vsel %vm510, %v148, 0
    %514 = vmatpush.msra.mxu0 0.0
    %515 = vmatpush.msra.mxu0 0.0
    %516 = vmatpush.msra.mxu0 0.0
    %517 = vmatpush.msra.mxu0 0.0
    %518 = vmatpush.msra.mxu0 0.0
    %519 = vmatpush.msra.mxu0 0.0
    %520 = vmatpush.msra.mxu0 0.0
    %521 = vmatpush.msra.mxu0 0.0
    %522 = vmatpush.msra.mxu0 0.0
    %523 = vmatpush.msra.mxu0 0.0
    %524 = vmatpush.msra.mxu0 0.0
    %525 = vmatpush.msra.mxu0 0.0
    %526 = vmatpush.msra.mxu0 0.0
    %527 = vmatpush.msra.mxu0 0.0
    %528 = vmatpush.msra.mxu0 %v512
    %529 = vmatpush.msra.mxu0 %v147
    %530 = vmatmul.f32.gmra.mxu0 %v151
    %v531 = vpop.f32.mrf.mxu0
    %v532 = vadd.f32 0.0, %v531
    %533 = vmatmul.f32.gmra.mxu0 %v154
    %v534 = vpop.f32.mrf.mxu0
    %v535 = vadd.f32 0.0, %v534
    %536 = vmatmul.f32.gmra.mxu0 %v157
    %v537 = vpop.f32.mrf.mxu0
    %v538 = vadd.f32 0.0, %v537
    %539 = vmatmul.f32.gmra.mxu0 %v160
    %v540 = vpop.f32.mrf.mxu0
    %v541 = vadd.f32 0.0, %v540
    %542 = vmatmul.f32.gmra.mxu0 %v163
    %v543 = vpop.f32.mrf.mxu0
    %v544 = vadd.f32 0.0, %v543
    %545 = vmatmul.f32.gmra.mxu0 %v166
    %v546 = vpop.f32.mrf.mxu0
    %v547 = vadd.f32 0.0, %v546
    %548 = vmatmul.f32.gmra.mxu0 %v169
    %v549 = vpop.f32.mrf.mxu0
    %v550 = vadd.f32 0.0, %v549
    %551 = vmatmul.f32.gmra.mxu0 %v172
    %v552 = vpop.f32.mrf.mxu0
    %v553 = vadd.f32 0.0, %v552
    %554 = vmatmul.f32.gmra.mxu0 %v175
    %v555 = vpop.f32.mrf.mxu0
    %v556 = vadd.f32 0.0, %v555
    %557 = vmatmul.f32.gmra.mxu0 %v178
    %v558 = vpop.f32.mrf.mxu0
    %v559 = vadd.f32 0.0, %v558
    %560 = vmatmul.f32.gmra.mxu0 %v181
    %v561 = vpop.f32.mrf.mxu0
    %v562 = vadd.f32 0.0, %v561
    %563 = vmatmul.f32.gmra.mxu0 %v184
    %v564 = vpop.f32.mrf.mxu0
    %v565 = vadd.f32 0.0, %v564
    %566 = vmatmul.f32.gmra.mxu0 %v187
    %v567 = vpop.f32.mrf.mxu0
    %v568 = vadd.f32 0.0, %v567
    %569 = vmatmul.f32.gmra.mxu0 %v190
    %v570 = vpop.f32.mrf.mxu0
    %v571 = vadd.f32 0.0, %v570
    %572 = vmatmul.f32.gmra.mxu0 %v193
    %v573 = vpop.f32.mrf.mxu0
    %v574 = vadd.f32 0.0, %v573
    %575 = vmatmul.f32.gmra.mxu0 %v196
    %v576 = vpop.f32.mrf.mxu0
    %v577 = vadd.f32 0.0, %v576
    %578 = vmatmul.f32.gmra.mxu0 %v199
    %v579 = vpop.f32.mrf.mxu0
    %v580 = vadd.f32 0.0, %v579
    %581 = vmatmul.f32.gmra.mxu0 %v202
    %v582 = vpop.f32.mrf.mxu0
    %v583 = vadd.f32 0.0, %v582
    %584 = vmatmul.f32.gmra.mxu0 %v205
    %v585 = vpop.f32.mrf.mxu0
    %v586 = vadd.f32 0.0, %v585
    %587 = vmatmul.f32.gmra.mxu0 %v208
    %v588 = vpop.f32.mrf.mxu0
    %v589 = vadd.f32 0.0, %v588
    %590 = vmatmul.f32.gmra.mxu0 %v211
    %v591 = vpop.f32.mrf.mxu0
    %v592 = vadd.f32 0.0, %v591
    %593 = vmatmul.f32.gmra.mxu0 %v214
    %v594 = vpop.f32.mrf.mxu0
    %v595 = vadd.f32 0.0, %v594
    %596 = vmatmul.f32.gmra.mxu0 %v217
    %v597 = vpop.f32.mrf.mxu0
    %v598 = vadd.f32 0.0, %v597
    %599 = vmatmul.f32.gmra.mxu0 %v220
    %v600 = vpop.f32.mrf.mxu0
    %v601 = vadd.f32 0.0, %v600
    %602 = vmatmul.f32.gmra.mxu0 %v223
    %v603 = vpop.f32.mrf.mxu0
    %v604 = vadd.f32 0.0, %v603
    %605 = vmatmul.f32.gmra.mxu0 %v226
    %v606 = vpop.f32.mrf.mxu0
    %v607 = vadd.f32 0.0, %v606
    %608 = vmatmul.f32.gmra.mxu0 %v229
    %v609 = vpop.f32.mrf.mxu0
    %v610 = vadd.f32 0.0, %v609
    %611 = vmatmul.f32.gmra.mxu0 %v232
    %v612 = vpop.f32.mrf.mxu0
    %v613 = vadd.f32 0.0, %v612
    %614 = vmatmul.f32.gmra.mxu0 %v235
    %v615 = vpop.f32.mrf.mxu0
    %v616 = vadd.f32 0.0, %v615
    %617 = vmatmul.f32.gmra.mxu0 %v238
    %v618 = vpop.f32.mrf.mxu0
    %v619 = vadd.f32 0.0, %v618
    %620 = vmatmul.f32.gmra.mxu0 %v241
    %v621 = vpop.f32.mrf.mxu0
    %v622 = vadd.f32 0.0, %v621
    %623 = vmatmul.f32.gmra.mxu0 %v244
    %v624 = vpop.f32.mrf.mxu0
    %v625 = vadd.f32 0.0, %v624
    %626 = vmatmul.f32.gmra.mxu0 %v247
    %v627 = vpop.f32.mrf.mxu0
    %v628 = vadd.f32 0.0, %v627
    %629 = vmatmul.f32.gmra.mxu0 %v250
    %v630 = vpop.f32.mrf.mxu0
    %v631 = vadd.f32 0.0, %v630
    %632 = vmatmul.f32.gmra.mxu0 %v253
    %v633 = vpop.f32.mrf.mxu0
    %v634 = vadd.f32 0.0, %v633
    %635 = vmatmul.f32.gmra.mxu0 %v256
    %v636 = vpop.f32.mrf.mxu0
    %v637 = vadd.f32 0.0, %v636
    %638 = vmatmul.f32.gmra.mxu0 %v259
    %v639 = vpop.f32.mrf.mxu0
    %v640 = vadd.f32 0.0, %v639
    %641 = vmatmul.f32.gmra.mxu0 %v262
    %v642 = vpop.f32.mrf.mxu0
    %v643 = vadd.f32 0.0, %v642
    %644 = vmatmul.f32.gmra.mxu0 %v265
    %v645 = vpop.f32.mrf.mxu0
    %v646 = vadd.f32 0.0, %v645
    %647 = vmatmul.f32.gmra.mxu0 %v268
    %v648 = vpop.f32.mrf.mxu0
    %v649 = vadd.f32 0.0, %v648
    %650 = vmatmul.f32.gmra.mxu0 %v271
    %v651 = vpop.f32.mrf.mxu0
    %v652 = vadd.f32 0.0, %v651
    %653 = vmatmul.f32.gmra.mxu0 %v274
    %v654 = vpop.f32.mrf.mxu0
    %v655 = vadd.f32 0.0, %v654
    %656 = vmatmul.f32.gmra.mxu0 %v277
    %v657 = vpop.f32.mrf.mxu0
    %v658 = vadd.f32 0.0, %v657
    %659 = vmatmul.f32.gmra.mxu0 %v280
    %v660 = vpop.f32.mrf.mxu0
    %v661 = vadd.f32 0.0, %v660
    %662 = vmatmul.f32.gmra.mxu0 %v283
    %v663 = vpop.f32.mrf.mxu0
    %v664 = vadd.f32 0.0, %v663
    %665 = vmatmul.f32.gmra.mxu0 %v286
    %v666 = vpop.f32.mrf.mxu0
    %v667 = vadd.f32 0.0, %v666
    %668 = vmatmul.f32.gmra.mxu0 %v289
    %v669 = vpop.f32.mrf.mxu0
    %v670 = vadd.f32 0.0, %v669
    %671 = vmatmul.f32.gmra.mxu0 %v292
    %v672 = vpop.f32.mrf.mxu0
    %v673 = vadd.f32 0.0, %v672
    %674 = vmatmul.f32.gmra.mxu0 %v295
    %v675 = vpop.f32.mrf.mxu0
    %v676 = vadd.f32 0.0, %v675
    %677 = vmatmul.f32.gmra.mxu0 %v298
    %v678 = vpop.f32.mrf.mxu0
    %v679 = vadd.f32 0.0, %v678
    %680 = vmatmul.f32.gmra.mxu0 %v301
    %v681 = vpop.f32.mrf.mxu0
    %v682 = vadd.f32 0.0, %v681
    %683 = vmatmul.f32.gmra.mxu0 %v304
    %v684 = vpop.f32.mrf.mxu0
    %v685 = vadd.f32 0.0, %v684
    %686 = vmatmul.f32.gmra.mxu0 %v307
    %v687 = vpop.f32.mrf.mxu0
    %v688 = vadd.f32 0.0, %v687
    %689 = vmatmul.f32.gmra.mxu0 %v310
    %v690 = vpop.f32.mrf.mxu0
    %v691 = vadd.f32 0.0, %v690
    %692 = vmatmul.f32.gmra.mxu0 %v313
    %v693 = vpop.f32.mrf.mxu0
    %v694 = vadd.f32 0.0, %v693
    %695 = vmatmul.f32.gmra.mxu0 %v316
    %v696 = vpop.f32.mrf.mxu0
    %v697 = vadd.f32 0.0, %v696
    %698 = vmatmul.f32.gmra.mxu0 %v319
    %v699 = vpop.f32.mrf.mxu0
    %v700 = vadd.f32 0.0, %v699
    %701 = vmatmul.f32.gmra.mxu0 %v322
    %v702 = vpop.f32.mrf.mxu0
    %v703 = vadd.f32 0.0, %v702
    %704 = vmatmul.f32.gmra.mxu0 %v325
    %v705 = vpop.f32.mrf.mxu0
    %v706 = vadd.f32 0.0, %v705
    %707 = vmatmul.f32.gmra.mxu0 %v328
    %v708 = vpop.f32.mrf.mxu0
    %v709 = vadd.f32 0.0, %v708
    %710 = vmatmul.f32.gmra.mxu0 %v331
    %v711 = vpop.f32.mrf.mxu0
    %v712 = vadd.f32 0.0, %v711
    %713 = vmatmul.f32.gmra.mxu0 %v334
    %v714 = vpop.f32.mrf.mxu0
    %v715 = vadd.f32 0.0, %v714
    %716 = vmatmul.f32.gmra.mxu0 %v337
    %v717 = vpop.f32.mrf.mxu0
    %v718 = vadd.f32 0.0, %v717
    %719 = vmatmul.f32.gmra.mxu0 %v340
    %v720 = vpop.f32.mrf.mxu0
    %v721 = vadd.f32 0.0, %v720
    %722 = vmatmul.f32.gmra.mxu0 %v343
    %v723 = vpop.f32.mrf.mxu0
    %v724 = vadd.f32 0.0, %v723
    %725 = vmatmul.f32.gmra.mxu0 %v346
    %v726 = vpop.f32.mrf.mxu0
    %v727 = vadd.f32 0.0, %v726
    %728 = vmatmul.f32.gmra.mxu0 %v349
    %v729 = vpop.f32.mrf.mxu0
    %v730 = vadd.f32 0.0, %v729
    %731 = vmatmul.f32.gmra.mxu0 %v352
    %v732 = vpop.f32.mrf.mxu0
    %v733 = vadd.f32 0.0, %v732
    %734 = vmatmul.f32.gmra.mxu0 %v355
    %v735 = vpop.f32.mrf.mxu0
    %v736 = vadd.f32 0.0, %v735
    %737 = vmatmul.f32.gmra.mxu0 %v358
    %v738 = vpop.f32.mrf.mxu0
    %v739 = vadd.f32 0.0, %v738
    %740 = vmatmul.f32.gmra.mxu0 %v361
    %v741 = vpop.f32.mrf.mxu0
    %v742 = vadd.f32 0.0, %v741
    %743 = vmatmul.f32.gmra.mxu0 %v364
    %v744 = vpop.f32.mrf.mxu0
    %v745 = vadd.f32 0.0, %v744
    %746 = vmatmul.f32.gmra.mxu0 %v367
    %v747 = vpop.f32.mrf.mxu0
    %v748 = vadd.f32 0.0, %v747
    %749 = vmatmul.f32.gmra.mxu0 %v370
    %v750 = vpop.f32.mrf.mxu0
    %v751 = vadd.f32 0.0, %v750
    %752 = vmatmul.f32.gmra.mxu0 %v373
    %v753 = vpop.f32.mrf.mxu0
    %v754 = vadd.f32 0.0, %v753
    %755 = vmatmul.f32.gmra.mxu0 %v376
    %v756 = vpop.f32.mrf.mxu0
    %v757 = vadd.f32 0.0, %v756
    %758 = vmatmul.f32.gmra.mxu0 %v379
    %v759 = vpop.f32.mrf.mxu0
    %v760 = vadd.f32 0.0, %v759
    %761 = vmatmul.f32.gmra.mxu0 %v382
    %v762 = vpop.f32.mrf.mxu0
    %v763 = vadd.f32 0.0, %v762
    %764 = vmatmul.f32.gmra.mxu0 %v385
    %v765 = vpop.f32.mrf.mxu0
    %v766 = vadd.f32 0.0, %v765
    %767 = vmatmul.f32.gmra.mxu0 %v388
    %v768 = vpop.f32.mrf.mxu0
    %v769 = vadd.f32 0.0, %v768
    %770 = vmatmul.f32.gmra.mxu0 %v391
    %v771 = vpop.f32.mrf.mxu0
    %v772 = vadd.f32 0.0, %v771
    %773 = vmatmul.f32.gmra.mxu0 %v394
    %v774 = vpop.f32.mrf.mxu0
    %v775 = vadd.f32 0.0, %v774
    %776 = vmatmul.f32.gmra.mxu0 %v397
    %v777 = vpop.f32.mrf.mxu0
    %v778 = vadd.f32 0.0, %v777
    %779 = vmatmul.f32.gmra.mxu0 %v400
    %v780 = vpop.f32.mrf.mxu0
    %v781 = vadd.f32 0.0, %v780
    %782 = vmatmul.f32.gmra.mxu0 %v403
    %v783 = vpop.f32.mrf.mxu0
    %v784 = vadd.f32 0.0, %v783
    %785 = vmatmul.f32.gmra.mxu0 %v406
    %v786 = vpop.f32.mrf.mxu0
    %v787 = vadd.f32 0.0, %v786
    %788 = vmatmul.f32.gmra.mxu0 %v409
    %v789 = vpop.f32.mrf.mxu0
    %v790 = vadd.f32 0.0, %v789
    %791 = vmatmul.f32.gmra.mxu0 %v412
    %v792 = vpop.f32.mrf.mxu0
    %v793 = vadd.f32 0.0, %v792
    %794 = vmatmul.f32.gmra.mxu0 %v415
    %v795 = vpop.f32.mrf.mxu0
    %v796 = vadd.f32 0.0, %v795
    %797 = vmatmul.f32.gmra.mxu0 %v418
    %v798 = vpop.f32.mrf.mxu0
    %v799 = vadd.f32 0.0, %v798
    %800 = vmatmul.f32.gmra.mxu0 %v421
    %v801 = vpop.f32.mrf.mxu0
    %v802 = vadd.f32 0.0, %v801
    %803 = vmatmul.f32.gmra.mxu0 %v424
    %v804 = vpop.f32.mrf.mxu0
    %v805 = vadd.f32 0.0, %v804
    %806 = vmatmul.f32.gmra.mxu0 %v427
    %v807 = vpop.f32.mrf.mxu0
    %v808 = vadd.f32 0.0, %v807
    %809 = vmatmul.f32.gmra.mxu0 %v430
    %v810 = vpop.f32.mrf.mxu0
    %v811 = vadd.f32 0.0, %v810
    %812 = vmatmul.f32.gmra.mxu0 %v433
    %v813 = vpop.f32.mrf.mxu0
    %v814 = vadd.f32 0.0, %v813
    %815 = vmatmul.f32.gmra.mxu0 %v436
    %v816 = vpop.f32.mrf.mxu0
    %v817 = vadd.f32 0.0, %v816
    %818 = vmatmul.f32.gmra.mxu0 %v439
    %v819 = vpop.f32.mrf.mxu0
    %v820 = vadd.f32 0.0, %v819
    %821 = vmatmul.f32.gmra.mxu0 %v442
    %v822 = vpop.f32.mrf.mxu0
    %v823 = vadd.f32 0.0, %v822
    %824 = vmatmul.f32.gmra.mxu0 %v445
    %v825 = vpop.f32.mrf.mxu0
    %v826 = vadd.f32 0.0, %v825
    %827 = vmatmul.f32.gmra.mxu0 %v448
    %v828 = vpop.f32.mrf.mxu0
    %v829 = vadd.f32 0.0, %v828
    %830 = vmatmul.f32.gmra.mxu0 %v451
    %v831 = vpop.f32.mrf.mxu0
    %v832 = vadd.f32 0.0, %v831
    %833 = vmatmul.f32.gmra.mxu0 %v454
    %v834 = vpop.f32.mrf.mxu0
    %v835 = vadd.f32 0.0, %v834
    %836 = vmatmul.f32.gmra.mxu0 %v457
    %v837 = vpop.f32.mrf.mxu0
    %v838 = vadd.f32 0.0, %v837
    %839 = vmatmul.f32.gmra.mxu0 %v460
    %v840 = vpop.f32.mrf.mxu0
    %v841 = vadd.f32 0.0, %v840
    %842 = vmatmul.f32.gmra.mxu0 %v463
    %v843 = vpop.f32.mrf.mxu0
    %v844 = vadd.f32 0.0, %v843
    %845 = vmatmul.f32.gmra.mxu0 %v466
    %v846 = vpop.f32.mrf.mxu0
    %v847 = vadd.f32 0.0, %v846
    %848 = vmatmul.f32.gmra.mxu0 %v469
    %v849 = vpop.f32.mrf.mxu0
    %v850 = vadd.f32 0.0, %v849
    %851 = vmatmul.f32.gmra.mxu0 %v472
    %v852 = vpop.f32.mrf.mxu0
    %v853 = vadd.f32 0.0, %v852
    %854 = vmatmul.f32.gmra.mxu0 %v475
    %v855 = vpop.f32.mrf.mxu0
    %v856 = vadd.f32 0.0, %v855
    %857 = vmatmul.f32.gmra.mxu0 %v478
    %v858 = vpop.f32.mrf.mxu0
    %v859 = vadd.f32 0.0, %v858
    %860 = vmatmul.f32.gmra.mxu0 %v481
    %v861 = vpop.f32.mrf.mxu0
    %v862 = vadd.f32 0.0, %v861
    %863 = vmatmul.f32.gmra.mxu0 %v484
    %v864 = vpop.f32.mrf.mxu0
    %v865 = vadd.f32 0.0, %v864
    %866 = vmatmul.f32.gmra.mxu0 %v487
    %v867 = vpop.f32.mrf.mxu0
    %v868 = vadd.f32 0.0, %v867
    %869 = vmatmul.f32.gmra.mxu0 %v490
    %v870 = vpop.f32.mrf.mxu0
    %v871 = vadd.f32 0.0, %v870
    %872 = vmatmul.f32.gmra.mxu0 %v493
    %v873 = vpop.f32.mrf.mxu0
    %v874 = vadd.f32 0.0, %v873
    %875 = vmatmul.f32.gmra.mxu0 %v496
    %v876 = vpop.f32.mrf.mxu0
    %v877 = vadd.f32 0.0, %v876
    %878 = vmatmul.f32.gmra.mxu0 %v499
    %v879 = vpop.f32.mrf.mxu0
    %v880 = vadd.f32 0.0, %v879
    %881 = vmatmul.f32.gmra.mxu0 %v502
    %v882 = vpop.f32.mrf.mxu0
    %v883 = vadd.f32 0.0, %v882
    %884 = vmatmul.f32.gmra.mxu0 %v505
    %v885 = vpop.f32.mrf.mxu0
    %v886 = vadd.f32 0.0, %v885
    %887 = vmatmul.f32.gmra.mxu0 %v508
    %v888 = vpop.f32.mrf.mxu0
    %v889 = vadd.f32 0.0, %v888
    %890 = vdwg.mxu0
    %v891 = vmul.f32 %v532, 1.442695
    %v892 = vpow.pop %v891
    %v893 = vmul.f32 %v535, 1.442695
    %v894 = vpow.pop %v893
    %v895 = vmul.f32 %v538, 1.442695
    %v896 = vpow.pop %v895
    %v897 = vmul.f32 %v541, 1.442695
    %v898 = vpow.pop %v897
    %v899 = vmul.f32 %v544, 1.442695
    %v900 = vpow.pop %v899
    %v901 = vmul.f32 %v547, 1.442695
    %v902 = vpow.pop %v901
    %v903 = vmul.f32 %v550, 1.442695
    %v904 = vpow.pop %v903
    %v905 = vmul.f32 %v553, 1.442695
    %v906 = vpow.pop %v905
    %v907 = vmul.f32 %v556, 1.442695
    %v908 = vpow.pop %v907
    %v909 = vmul.f32 %v559, 1.442695
    %v910 = vpow.pop %v909
    %v911 = vmul.f32 %v562, 1.442695
    %v912 = vpow.pop %v911
    %v913 = vmul.f32 %v565, 1.442695
    %v914 = vpow.pop %v913
    %v915 = vmul.f32 %v568, 1.442695
    %v916 = vpow.pop %v915
    %v917 = vmul.f32 %v571, 1.442695
    %v918 = vpow.pop %v917
    %v919 = vmul.f32 %v574, 1.442695
    %v920 = vpow.pop %v919
    %v921 = vmul.f32 %v577, 1.442695
    %v922 = vpow.pop %v921
    %v923 = vmul.f32 %v580, 1.442695
    %v924 = vpow.pop %v923
    %v925 = vmul.f32 %v583, 1.442695
    %v926 = vpow.pop %v925
    %v927 = vmul.f32 %v586, 1.442695
    %v928 = vpow.pop %v927
    %v929 = vmul.f32 %v589, 1.442695
    %v930 = vpow.pop %v929
    %v931 = vmul.f32 %v592, 1.442695
    %v932 = vpow.pop %v931
    %v933 = vmul.f32 %v595, 1.442695
    %v934 = vpow.pop %v933
    %v935 = vmul.f32 %v598, 1.442695
    %v936 = vpow.pop %v935
    %v937 = vmul.f32 %v601, 1.442695
    %v938 = vpow.pop %v937
    %v939 = vmul.f32 %v604, 1.442695
    %v940 = vpow.pop %v939
    %v941 = vmul.f32 %v607, 1.442695
    %v942 = vpow.pop %v941
    %v943 = vmul.f32 %v610, 1.442695
    %v944 = vpow.pop %v943
    %v945 = vmul.f32 %v613, 1.442695
    %v946 = vpow.pop %v945
    %v947 = vmul.f32 %v616, 1.442695
    %v948 = vpow.pop %v947
    %v949 = vmul.f32 %v619, 1.442695
    %v950 = vpow.pop %v949
    %v951 = vmul.f32 %v622, 1.442695
    %v952 = vpow.pop %v951
    %v953 = vmul.f32 %v625, 1.442695
    %v954 = vpow.pop %v953
    %v955 = vmul.f32 %v628, 1.442695
    %v956 = vpow.pop %v955
    %v957 = vmul.f32 %v631, 1.442695
    %v958 = vpow.pop %v957
    %v959 = vmul.f32 %v634, 1.442695
    %v960 = vpow.pop %v959
    %v961 = vmul.f32 %v637, 1.442695
    %v962 = vpow.pop %v961
    %v963 = vmul.f32 %v640, 1.442695
    %v964 = vpow.pop %v963
    %v965 = vmul.f32 %v643, 1.442695
    %v966 = vpow.pop %v965
    %v967 = vmul.f32 %v646, 1.442695
    %v968 = vpow.pop %v967
    %v969 = vmul.f32 %v649, 1.442695
    %v970 = vpow.pop %v969
    %v971 = vmul.f32 %v652, 1.442695
    %v972 = vpow.pop %v971
    %v973 = vmul.f32 %v655, 1.442695
    %v974 = vpow.pop %v973
    %v975 = vmul.f32 %v658, 1.442695
    %v976 = vpow.pop %v975
    %v977 = vmul.f32 %v661, 1.442695
    %v978 = vpow.pop %v977
    %v979 = vmul.f32 %v664, 1.442695
    %v980 = vpow.pop %v979
    %v981 = vmul.f32 %v667, 1.442695
    %v982 = vpow.pop %v981
    %v983 = vmul.f32 %v670, 1.442695
    %v984 = vpow.pop %v983
    %v985 = vmul.f32 %v673, 1.442695
    %v986 = vpow.pop %v985
    %v987 = vmul.f32 %v676, 1.442695
    %v988 = vpow.pop %v987
    %v989 = vmul.f32 %v679, 1.442695
    %v990 = vpow.pop %v989
    %v991 = vmul.f32 %v682, 1.442695
    %v992 = vpow.pop %v991
    %v993 = vmul.f32 %v685, 1.442695
    %v994 = vpow.pop %v993
    %v995 = vmul.f32 %v688, 1.442695
    %v996 = vpow.pop %v995
    %v997 = vmul.f32 %v691, 1.442695
    %v998 = vpow.pop %v997
    %v999 = vmul.f32 %v694, 1.442695
    %v1000 = vpow.pop %v999
    %v1001 = vmul.f32 %v697, 1.442695
    %v1002 = vpow.pop %v1001
    %v1003 = vmul.f32 %v700, 1.442695
    %v1004 = vpow.pop %v1003
    %v1005 = vmul.f32 %v703, 1.442695
    %v1006 = vpow.pop %v1005
    %v1007 = vmul.f32 %v706, 1.442695
    %v1008 = vpow.pop %v1007
    %v1009 = vmul.f32 %v709, 1.442695
    %v1010 = vpow.pop %v1009
    %v1011 = vmul.f32 %v712, 1.442695
    %v1012 = vpow.pop %v1011
    %v1013 = vmul.f32 %v715, 1.442695
    %v1014 = vpow.pop %v1013
    %v1015 = vmul.f32 %v718, 1.442695
    %v1016 = vpow.pop %v1015
    %v1017 = vmul.f32 %v721, 1.442695
    %v1018 = vpow.pop %v1017
    %v1019 = vmul.f32 %v724, 1.442695
    %v1020 = vpow.pop %v1019
    %v1021 = vmul.f32 %v727, 1.442695
    %v1022 = vpow.pop %v1021
    %v1023 = vmul.f32 %v730, 1.442695
    %v1024 = vpow.pop %v1023
    %v1025 = vmul.f32 %v733, 1.442695
    %v1026 = vpow.pop %v1025
    %v1027 = vmul.f32 %v736, 1.442695
    %v1028 = vpow.pop %v1027
    %v1029 = vmul.f32 %v739, 1.442695
    %v1030 = vpow.pop %v1029
    %v1031 = vmul.f32 %v742, 1.442695
    %v1032 = vpow.pop %v1031
    %v1033 = vmul.f32 %v745, 1.442695
    %v1034 = vpow.pop %v1033
    %v1035 = vmul.f32 %v748, 1.442695
    %v1036 = vpow.pop %v1035
    %v1037 = vmul.f32 %v751, 1.442695
    %v1038 = vpow.pop %v1037
    %v1039 = vmul.f32 %v754, 1.442695
    %v1040 = vpow.pop %v1039
    %v1041 = vmul.f32 %v757, 1.442695
    %v1042 = vpow.pop %v1041
    %v1043 = vmul.f32 %v760, 1.442695
    %v1044 = vpow.pop %v1043
    %v1045 = vmul.f32 %v763, 1.442695
    %v1046 = vpow.pop %v1045
    %v1047 = vmul.f32 %v766, 1.442695
    %v1048 = vpow.pop %v1047
    %v1049 = vmul.f32 %v769, 1.442695
    %v1050 = vpow.pop %v1049
    %v1051 = vmul.f32 %v772, 1.442695
    %v1052 = vpow.pop %v1051
    %v1053 = vmul.f32 %v775, 1.442695
    %v1054 = vpow.pop %v1053
    %v1055 = vmul.f32 %v778, 1.442695
    %v1056 = vpow.pop %v1055
    %v1057 = vmul.f32 %v781, 1.442695
    %v1058 = vpow.pop %v1057
    %v1059 = vmul.f32 %v784, 1.442695
    %v1060 = vpow.pop %v1059
    %v1061 = vmul.f32 %v787, 1.442695
    %v1062 = vpow.pop %v1061
    %v1063 = vmul.f32 %v790, 1.442695
    %v1064 = vpow.pop %v1063
    %v1065 = vmul.f32 %v793, 1.442695
    %v1066 = vpow.pop %v1065
    %v1067 = vmul.f32 %v796, 1.442695
    %v1068 = vpow.pop %v1067
    %v1069 = vmul.f32 %v799, 1.442695
    %v1070 = vpow.pop %v1069
    %v1071 = vmul.f32 %v802, 1.442695
    %v1072 = vpow.pop %v1071
    %v1073 = vmul.f32 %v805, 1.442695
    %v1074 = vpow.pop %v1073
    %v1075 = vmul.f32 %v808, 1.442695
    %v1076 = vpow.pop %v1075
    %v1077 = vmul.f32 %v811, 1.442695
    %v1078 = vpow.pop %v1077
    %v1079 = vmul.f32 %v814, 1.442695
    %v1080 = vpow.pop %v1079
    %v1081 = vmul.f32 %v817, 1.442695
    %v1082 = vpow.pop %v1081
    %v1083 = vmul.f32 %v820, 1.442695
    %v1084 = vpow.pop %v1083
    %v1085 = vmul.f32 %v823, 1.442695
    %v1086 = vpow.pop %v1085
    %v1087 = vmul.f32 %v826, 1.442695
    %v1088 = vpow.pop %v1087
    %v1089 = vmul.f32 %v829, 1.442695
    %v1090 = vpow.pop %v1089
    %v1091 = vmul.f32 %v832, 1.442695
    %v1092 = vpow.pop %v1091
    %v1093 = vmul.f32 %v835, 1.442695
    %v1094 = vpow.pop %v1093
    %v1095 = vmul.f32 %v838, 1.442695
    %v1096 = vpow.pop %v1095
    %v1097 = vmul.f32 %v841, 1.442695
    %v1098 = vpow.pop %v1097
    %v1099 = vmul.f32 %v844, 1.442695
    %v1100 = vpow.pop %v1099
    %v1101 = vmul.f32 %v847, 1.442695
    %v1102 = vpow.pop %v1101
    %v1103 = vmul.f32 %v850, 1.442695
    %v1104 = vpow.pop %v1103
    %v1105 = vmul.f32 %v853, 1.442695
    %v1106 = vpow.pop %v1105
    %v1107 = vmul.f32 %v856, 1.442695
    %v1108 = vpow.pop %v1107
    %v1109 = vmul.f32 %v859, 1.442695
    %v1110 = vpow.pop %v1109
    %v1111 = vmul.f32 %v862, 1.442695
    %v1112 = vpow.pop %v1111
    %v1113 = vmul.f32 %v865, 1.442695
    %v1114 = vpow.pop %v1113
    %v1115 = vmul.f32 %v868, 1.442695
    %v1116 = vpow.pop %v1115
    %v1117 = vmul.f32 %v871, 1.442695
    %v1118 = vpow.pop %v1117
    %v1119 = vmul.f32 %v874, 1.442695
    %v1120 = vpow.pop %v1119
    %v1121 = vmul.f32 %v877, 1.442695
    %v1122 = vpow.pop %v1121
    %v1123 = vmul.f32 %v880, 1.442695
    %v1124 = vpow.pop %v1123
    %v1125 = vmul.f32 %v883, 1.442695
    %v1126 = vpow.pop %v1125
    %v1127 = vmul.f32 %v886, 1.442695
    %v1128 = vpow.pop %v1127
    %v1129 = vmul.f32 %v889, 1.442695
    %v1130 = vpow.pop %v1129
    %v1131 = vadd.f32 %v892, 2.0
    %v1132 = vadd.f32 %v894, 2.0
    %v1133 = vadd.f32 %v896, 2.0
    %v1134 = vadd.f32 %v898, 2.0
    %v1135 = vadd.f32 %v900, 2.0
    %v1136 = vadd.f32 %v902, 2.0
    %v1137 = vadd.f32 %v904, 2.0
    %v1138 = vadd.f32 %v906, 2.0
    %v1139 = vadd.f32 %v908, 2.0
    %v1140 = vadd.f32 %v910, 2.0
    %v1141 = vadd.f32 %v912, 2.0
    %v1142 = vadd.f32 %v914, 2.0
    %v1143 = vadd.f32 %v916, 2.0
    %v1144 = vadd.f32 %v918, 2.0
    %v1145 = vadd.f32 %v920, 2.0
    %v1146 = vadd.f32 %v922, 2.0
    %v1147 = vadd.f32 %v924, 2.0
    %v1148 = vadd.f32 %v926, 2.0
    %v1149 = vadd.f32 %v928, 2.0
    %v1150 = vadd.f32 %v930, 2.0
    %v1151 = vadd.f32 %v932, 2.0
    %v1152 = vadd.f32 %v934, 2.0
    %v1153 = vadd.f32 %v936, 2.0
    %v1154 = vadd.f32 %v938, 2.0
    %v1155 = vadd.f32 %v940, 2.0
    %v1156 = vadd.f32 %v942, 2.0
    %v1157 = vadd.f32 %v944, 2.0
    %v1158 = vadd.f32 %v946, 2.0
    %v1159 = vadd.f32 %v948, 2.0
    %v1160 = vadd.f32 %v950, 2.0
    %v1161 = vadd.f32 %v952, 2.0
    %v1162 = vadd.f32 %v954, 2.0
    %v1163 = vadd.f32 %v956, 2.0
    %v1164 = vadd.f32 %v958, 2.0
    %v1165 = vadd.f32 %v960, 2.0
    %v1166 = vadd.f32 %v962, 2.0
    %v1167 = vadd.f32 %v964, 2.0
    %v1168 = vadd.f32 %v966, 2.0
    %v1169 = vadd.f32 %v968, 2.0
    %v1170 = vadd.f32 %v970, 2.0
    %v1171 = vadd.f32 %v972, 2.0
    %v1172 = vadd.f32 %v974, 2.0
    %v1173 = vadd.f32 %v976, 2.0
    %v1174 = vadd.f32 %v978, 2.0
    %v1175 = vadd.f32 %v980, 2.0
    %v1176 = vadd.f32 %v982, 2.0
    %v1177 = vadd.f32 %v984, 2.0
    %v1178 = vadd.f32 %v986, 2.0
    %v1179 = vadd.f32 %v988, 2.0
    %v1180 = vadd.f32 %v990, 2.0
    %v1181 = vadd.f32 %v992, 2.0
    %v1182 = vadd.f32 %v994, 2.0
    %v1183 = vadd.f32 %v996, 2.0
    %v1184 = vadd.f32 %v998, 2.0
    %v1185 = vadd.f32 %v1000, 2.0
    %v1186 = vadd.f32 %v1002, 2.0
    %v1187 = vadd.f32 %v1004, 2.0
    %v1188 = vadd.f32 %v1006, 2.0
    %v1189 = vadd.f32 %v1008, 2.0
    %v1190 = vadd.f32 %v1010, 2.0
    %v1191 = vadd.f32 %v1012, 2.0
    %v1192 = vadd.f32 %v1014, 2.0
    %v1193 = vadd.f32 %v1016, 2.0
    %v1194 = vadd.f32 %v1018, 2.0
    %v1195 = vadd.f32 %v1020, 2.0
    %v1196 = vadd.f32 %v1022, 2.0
    %v1197 = vadd.f32 %v1024, 2.0
    %v1198 = vadd.f32 %v1026, 2.0
    %v1199 = vadd.f32 %v1028, 2.0
    %v1200 = vadd.f32 %v1030, 2.0
    %v1201 = vadd.f32 %v1032, 2.0
    %v1202 = vadd.f32 %v1034, 2.0
    %v1203 = vadd.f32 %v1036, 2.0
    %v1204 = vadd.f32 %v1038, 2.0
    %v1205 = vadd.f32 %v1040, 2.0
    %v1206 = vadd.f32 %v1042, 2.0
    %v1207 = vadd.f32 %v1044, 2.0
    %v1208 = vadd.f32 %v1046, 2.0
    %v1209 = vadd.f32 %v1048, 2.0
    %v1210 = vadd.f32 %v1050, 2.0
    %v1211 = vadd.f32 %v1052, 2.0
    %v1212 = vadd.f32 %v1054, 2.0
    %v1213 = vadd.f32 %v1056, 2.0
    %v1214 = vadd.f32 %v1058, 2.0
    %v1215 = vadd.f32 %v1060, 2.0
    %v1216 = vadd.f32 %v1062, 2.0
    %v1217 = vadd.f32 %v1064, 2.0
    %v1218 = vadd.f32 %v1066, 2.0
    %v1219 = vadd.f32 %v1068, 2.0
    %v1220 = vadd.f32 %v1070, 2.0
    %v1221 = vadd.f32 %v1072, 2.0
    %v1222 = vadd.f32 %v1074, 2.0
    %v1223 = vadd.f32 %v1076, 2.0
    %v1224 = vadd.f32 %v1078, 2.0
    %v1225 = vadd.f32 %v1080, 2.0
    %v1226 = vadd.f32 %v1082, 2.0
    %v1227 = vadd.f32 %v1084, 2.0
    %v1228 = vadd.f32 %v1086, 2.0
    %v1229 = vadd.f32 %v1088, 2.0
    %v1230 = vadd.f32 %v1090, 2.0
    %v1231 = vadd.f32 %v1092, 2.0
    %v1232 = vadd.f32 %v1094, 2.0
    %v1233 = vadd.f32 %v1096, 2.0
    %v1234 = vadd.f32 %v1098, 2.0
    %v1235 = vadd.f32 %v1100, 2.0
    %v1236 = vadd.f32 %v1102, 2.0
    %v1237 = vadd.f32 %v1104, 2.0
    %v1238 = vadd.f32 %v1106, 2.0
    %v1239 = vadd.f32 %v1108, 2.0
    %v1240 = vadd.f32 %v1110, 2.0
    %v1241 = vadd.f32 %v1112, 2.0
    %v1242 = vadd.f32 %v1114, 2.0
    %v1243 = vadd.f32 %v1116, 2.0
    %v1244 = vadd.f32 %v1118, 2.0
    %v1245 = vadd.f32 %v1120, 2.0
    %v1246 = vadd.f32 %v1122, 2.0
    %v1247 = vadd.f32 %v1124, 2.0
    %v1248 = vadd.f32 %v1126, 2.0
    %v1249 = vadd.f32 %v1128, 2.0
    %v1250 = vadd.f32 %v1130, 2.0
    %v1251 = vmul.f32 %v892, %v1131
    %v1252 = vmul.f32 %v894, %v1132
    %v1253 = vmul.f32 %v896, %v1133
    %v1254 = vmul.f32 %v898, %v1134
    %v1255 = vmul.f32 %v900, %v1135
    %v1256 = vmul.f32 %v902, %v1136
    %v1257 = vmul.f32 %v904, %v1137
    %v1258 = vmul.f32 %v906, %v1138
    %v1259 = vmul.f32 %v908, %v1139
    %v1260 = vmul.f32 %v910, %v1140
    %v1261 = vmul.f32 %v912, %v1141
    %v1262 = vmul.f32 %v914, %v1142
    %v1263 = vmul.f32 %v916, %v1143
    %v1264 = vmul.f32 %v918, %v1144
    %v1265 = vmul.f32 %v920, %v1145
    %v1266 = vmul.f32 %v922, %v1146
    %v1267 = vmul.f32 %v924, %v1147
    %v1268 = vmul.f32 %v926, %v1148
    %v1269 = vmul.f32 %v928, %v1149
    %v1270 = vmul.f32 %v930, %v1150
    %v1271 = vmul.f32 %v932, %v1151
    %v1272 = vmul.f32 %v934, %v1152
    %v1273 = vmul.f32 %v936, %v1153
    %v1274 = vmul.f32 %v938, %v1154
    %v1275 = vmul.f32 %v940, %v1155
    %v1276 = vmul.f32 %v942, %v1156
    %v1277 = vmul.f32 %v944, %v1157
    %v1278 = vmul.f32 %v946, %v1158
    %v1279 = vmul.f32 %v948, %v1159
    %v1280 = vmul.f32 %v950, %v1160
    %v1281 = vmul.f32 %v952, %v1161
    %v1282 = vmul.f32 %v954, %v1162
    %v1283 = vmul.f32 %v956, %v1163
    %v1284 = vmul.f32 %v958, %v1164
    %v1285 = vmul.f32 %v960, %v1165
    %v1286 = vmul.f32 %v962, %v1166
    %v1287 = vmul.f32 %v964, %v1167
    %v1288 = vmul.f32 %v966, %v1168
    %v1289 = vmul.f32 %v968, %v1169
    %v1290 = vmul.f32 %v970, %v1170
    %v1291 = vmul.f32 %v972, %v1171
    %v1292 = vmul.f32 %v974, %v1172
    %v1293 = vmul.f32 %v976, %v1173
    %v1294 = vmul.f32 %v978, %v1174
    %v1295 = vmul.f32 %v980, %v1175
    %v1296 = vmul.f32 %v982, %v1176
    %v1297 = vmul.f32 %v984, %v1177
    %v1298 = vmul.f32 %v986, %v1178
    %v1299 = vmul.f32 %v988, %v1179
    %v1300 = vmul.f32 %v990, %v1180
    %v1301 = vmul.f32 %v992, %v1181
    %v1302 = vmul.f32 %v994, %v1182
    %v1303 = vmul.f32 %v996, %v1183
    %v1304 = vmul.f32 %v998, %v1184
    %v1305 = vmul.f32 %v1000, %v1185
    %v1306 = vmul.f32 %v1002, %v1186
    %v1307 = vmul.f32 %v1004, %v1187
    %v1308 = vmul.f32 %v1006, %v1188
    %v1309 = vmul.f32 %v1008, %v1189
    %v1310 = vmul.f32 %v1010, %v1190
    %v1311 = vmul.f32 %v1012, %v1191
    %v1312 = vmul.f32 %v1014, %v1192
    %v1313 = vmul.f32 %v1016, %v1193
    %v1314 = vmul.f32 %v1018, %v1194
    %v1315 = vmul.f32 %v1020, %v1195
    %v1316 = vmul.f32 %v1022, %v1196
    %v1317 = vmul.f32 %v1024, %v1197
    %v1318 = vmul.f32 %v1026, %v1198
    %v1319 = vmul.f32 %v1028, %v1199
    %v1320 = vmul.f32 %v1030, %v1200
    %v1321 = vmul.f32 %v1032, %v1201
    %v1322 = vmul.f32 %v1034, %v1202
    %v1323 = vmul.f32 %v1036, %v1203
    %v1324 = vmul.f32 %v1038, %v1204
    %v1325 = vmul.f32 %v1040, %v1205
    %v1326 = vmul.f32 %v1042, %v1206
    %v1327 = vmul.f32 %v1044, %v1207
    %v1328 = vmul.f32 %v1046, %v1208
    %v1329 = vmul.f32 %v1048, %v1209
    %v1330 = vmul.f32 %v1050, %v1210
    %v1331 = vmul.f32 %v1052, %v1211
    %v1332 = vmul.f32 %v1054, %v1212
    %v1333 = vmul.f32 %v1056, %v1213
    %v1334 = vmul.f32 %v1058, %v1214
    %v1335 = vmul.f32 %v1060, %v1215
    %v1336 = vmul.f32 %v1062, %v1216
    %v1337 = vmul.f32 %v1064, %v1217
    %v1338 = vmul.f32 %v1066, %v1218
    %v1339 = vmul.f32 %v1068, %v1219
    %v1340 = vmul.f32 %v1070, %v1220
    %v1341 = vmul.f32 %v1072, %v1221
    %v1342 = vmul.f32 %v1074, %v1222
    %v1343 = vmul.f32 %v1076, %v1223
    %v1344 = vmul.f32 %v1078, %v1224
    %v1345 = vmul.f32 %v1080, %v1225
    %v1346 = vmul.f32 %v1082, %v1226
    %v1347 = vmul.f32 %v1084, %v1227
    %v1348 = vmul.f32 %v1086, %v1228
    %v1349 = vmul.f32 %v1088, %v1229
    %v1350 = vmul.f32 %v1090, %v1230
    %v1351 = vmul.f32 %v1092, %v1231
    %v1352 = vmul.f32 %v1094, %v1232
    %v1353 = vmul.f32 %v1096, %v1233
    %v1354 = vmul.f32 %v1098, %v1234
    %v1355 = vmul.f32 %v1100, %v1235
    %v1356 = vmul.f32 %v1102, %v1236
    %v1357 = vmul.f32 %v1104, %v1237
    %v1358 = vmul.f32 %v1106, %v1238
    %v1359 = vmul.f32 %v1108, %v1239
    %v1360 = vmul.f32 %v1110, %v1240
    %v1361 = vmul.f32 %v1112, %v1241
    %v1362 = vmul.f32 %v1114, %v1242
    %v1363 = vmul.f32 %v1116, %v1243
    %v1364 = vmul.f32 %v1118, %v1244
    %v1365 = vmul.f32 %v1120, %v1245
    %v1366 = vmul.f32 %v1122, %v1246
    %v1367 = vmul.f32 %v1124, %v1247
    %v1368 = vmul.f32 %v1126, %v1248
    %v1369 = vmul.f32 %v1128, %v1249
    %v1370 = vmul.f32 %v1130, %v1250
    %v1371 = vadd.f32 %v1251, 2.0
    %v1372 = vadd.f32 %v1252, 2.0
    %v1373 = vadd.f32 %v1253, 2.0
    %v1374 = vadd.f32 %v1254, 2.0
    %v1375 = vadd.f32 %v1255, 2.0
    %v1376 = vadd.f32 %v1256, 2.0
    %v1377 = vadd.f32 %v1257, 2.0
    %v1378 = vadd.f32 %v1258, 2.0
    %v1379 = vadd.f32 %v1259, 2.0
    %v1380 = vadd.f32 %v1260, 2.0
    %v1381 = vadd.f32 %v1261, 2.0
    %v1382 = vadd.f32 %v1262, 2.0
    %v1383 = vadd.f32 %v1263, 2.0
    %v1384 = vadd.f32 %v1264, 2.0
    %v1385 = vadd.f32 %v1265, 2.0
    %v1386 = vadd.f32 %v1266, 2.0
    %v1387 = vadd.f32 %v1267, 2.0
    %v1388 = vadd.f32 %v1268, 2.0
    %v1389 = vadd.f32 %v1269, 2.0
    %v1390 = vadd.f32 %v1270, 2.0
    %v1391 = vadd.f32 %v1271, 2.0
    %v1392 = vadd.f32 %v1272, 2.0
    %v1393 = vadd.f32 %v1273, 2.0
    %v1394 = vadd.f32 %v1274, 2.0
    %v1395 = vadd.f32 %v1275, 2.0
    %v1396 = vadd.f32 %v1276, 2.0
    %v1397 = vadd.f32 %v1277, 2.0
    %v1398 = vadd.f32 %v1278, 2.0
    %v1399 = vadd.f32 %v1279, 2.0
    %v1400 = vadd.f32 %v1280, 2.0
    %v1401 = vadd.f32 %v1281, 2.0
    %v1402 = vadd.f32 %v1282, 2.0
    %v1403 = vadd.f32 %v1283, 2.0
    %v1404 = vadd.f32 %v1284, 2.0
    %v1405 = vadd.f32 %v1285, 2.0
    %v1406 = vadd.f32 %v1286, 2.0
    %v1407 = vadd.f32 %v1287, 2.0
    %v1408 = vadd.f32 %v1288, 2.0
    %v1409 = vadd.f32 %v1289, 2.0
    %v1410 = vadd.f32 %v1290, 2.0
    %v1411 = vadd.f32 %v1291, 2.0
    %v1412 = vadd.f32 %v1292, 2.0
    %v1413 = vadd.f32 %v1293, 2.0
    %v1414 = vadd.f32 %v1294, 2.0
    %v1415 = vadd.f32 %v1295, 2.0
    %v1416 = vadd.f32 %v1296, 2.0
    %v1417 = vadd.f32 %v1297, 2.0
    %v1418 = vadd.f32 %v1298, 2.0
    %v1419 = vadd.f32 %v1299, 2.0
    %v1420 = vadd.f32 %v1300, 2.0
    %v1421 = vadd.f32 %v1301, 2.0
    %v1422 = vadd.f32 %v1302, 2.0
    %v1423 = vadd.f32 %v1303, 2.0
    %v1424 = vadd.f32 %v1304, 2.0
    %v1425 = vadd.f32 %v1305, 2.0
    %v1426 = vadd.f32 %v1306, 2.0
    %v1427 = vadd.f32 %v1307, 2.0
    %v1428 = vadd.f32 %v1308, 2.0
    %v1429 = vadd.f32 %v1309, 2.0
    %v1430 = vadd.f32 %v1310, 2.0
    %v1431 = vadd.f32 %v1311, 2.0
    %v1432 = vadd.f32 %v1312, 2.0
    %v1433 = vadd.f32 %v1313, 2.0
    %v1434 = vadd.f32 %v1314, 2.0
    %v1435 = vadd.f32 %v1315, 2.0
    %v1436 = vadd.f32 %v1316, 2.0
    %v1437 = vadd.f32 %v1317, 2.0
    %v1438 = vadd.f32 %v1318, 2.0
    %v1439 = vadd.f32 %v1319, 2.0
    %v1440 = vadd.f32 %v1320, 2.0
    %v1441 = vadd.f32 %v1321, 2.0
    %v1442 = vadd.f32 %v1322, 2.0
    %v1443 = vadd.f32 %v1323, 2.0
    %v1444 = vadd.f32 %v1324, 2.0
    %v1445 = vadd.f32 %v1325, 2.0
    %v1446 = vadd.f32 %v1326, 2.0
    %v1447 = vadd.f32 %v1327, 2.0
    %v1448 = vadd.f32 %v1328, 2.0
    %v1449 = vadd.f32 %v1329, 2.0
    %v1450 = vadd.f32 %v1330, 2.0
    %v1451 = vadd.f32 %v1331, 2.0
    %v1452 = vadd.f32 %v1332, 2.0
    %v1453 = vadd.f32 %v1333, 2.0
    %v1454 = vadd.f32 %v1334, 2.0
    %v1455 = vadd.f32 %v1335, 2.0
    %v1456 = vadd.f32 %v1336, 2.0
    %v1457 = vadd.f32 %v1337, 2.0
    %v1458 = vadd.f32 %v1338, 2.0
    %v1459 = vadd.f32 %v1339, 2.0
    %v1460 = vadd.f32 %v1340, 2.0
    %v1461 = vadd.f32 %v1341, 2.0
    %v1462 = vadd.f32 %v1342, 2.0
    %v1463 = vadd.f32 %v1343, 2.0
    %v1464 = vadd.f32 %v1344, 2.0
    %v1465 = vadd.f32 %v1345, 2.0
    %v1466 = vadd.f32 %v1346, 2.0
    %v1467 = vadd.f32 %v1347, 2.0
    %v1468 = vadd.f32 %v1348, 2.0
    %v1469 = vadd.f32 %v1349, 2.0
    %v1470 = vadd.f32 %v1350, 2.0
    %v1471 = vadd.f32 %v1351, 2.0
    %v1472 = vadd.f32 %v1352, 2.0
    %v1473 = vadd.f32 %v1353, 2.0
    %v1474 = vadd.f32 %v1354, 2.0
    %v1475 = vadd.f32 %v1355, 2.0
    %v1476 = vadd.f32 %v1356, 2.0
    %v1477 = vadd.f32 %v1357, 2.0
    %v1478 = vadd.f32 %v1358, 2.0
    %v1479 = vadd.f32 %v1359, 2.0
    %v1480 = vadd.f32 %v1360, 2.0
    %v1481 = vadd.f32 %v1361, 2.0
    %v1482 = vadd.f32 %v1362, 2.0
    %v1483 = vadd.f32 %v1363, 2.0
    %v1484 = vadd.f32 %v1364, 2.0
    %v1485 = vadd.f32 %v1365, 2.0
    %v1486 = vadd.f32 %v1366, 2.0
    %v1487 = vadd.f32 %v1367, 2.0
    %v1488 = vadd.f32 %v1368, 2.0
    %v1489 = vadd.f32 %v1369, 2.0
    %v1490 = vadd.f32 %v1370, 2.0
    %v1491 = vrcp.pop %v1371
    %v1492 = vrcp.pop %v1372
    %v1493 = vrcp.pop %v1373
    %v1494 = vrcp.pop %v1374
    %v1495 = vrcp.pop %v1375
    %v1496 = vrcp.pop %v1376
    %v1497 = vrcp.pop %v1377
    %v1498 = vrcp.pop %v1378
    %v1499 = vrcp.pop %v1379
    %v1500 = vrcp.pop %v1380
    %v1501 = vrcp.pop %v1381
    %v1502 = vrcp.pop %v1382
    %v1503 = vrcp.pop %v1383
    %v1504 = vrcp.pop %v1384
    %v1505 = vrcp.pop %v1385
    %v1506 = vrcp.pop %v1386
    %v1507 = vrcp.pop %v1387
    %v1508 = vrcp.pop %v1388
    %v1509 = vrcp.pop %v1389
    %v1510 = vrcp.pop %v1390
    %v1511 = vrcp.pop %v1391
    %v1512 = vrcp.pop %v1392
    %v1513 = vrcp.pop %v1393
    %v1514 = vrcp.pop %v1394
    %v1515 = vrcp.pop %v1395
    %v1516 = vrcp.pop %v1396
    %v1517 = vrcp.pop %v1397
    %v1518 = vrcp.pop %v1398
    %v1519 = vrcp.pop %v1399
    %v1520 = vrcp.pop %v1400
    %v1521 = vrcp.pop %v1401
    %v1522 = vrcp.pop %v1402
    %v1523 = vrcp.pop %v1403
    %v1524 = vrcp.pop %v1404
    %v1525 = vrcp.pop %v1405
    %v1526 = vrcp.pop %v1406
    %v1527 = vrcp.pop %v1407
    %v1528 = vrcp.pop %v1408
    %v1529 = vrcp.pop %v1409
    %v1530 = vrcp.pop %v1410
    %v1531 = vrcp.pop %v1411
    %v1532 = vrcp.pop %v1412
    %v1533 = vrcp.pop %v1413
    %v1534 = vrcp.pop %v1414
    %v1535 = vrcp.pop %v1415
    %v1536 = vrcp.pop %v1416
    %v1537 = vrcp.pop %v1417
    %v1538 = vrcp.pop %v1418
    %v1539 = vrcp.pop %v1419
    %v1540 = vrcp.pop %v1420
    %v1541 = vrcp.pop %v1421
    %v1542 = vrcp.pop %v1422
    %v1543 = vrcp.pop %v1423
    %v1544 = vrcp.pop %v1424
    %v1545 = vrcp.pop %v1425
    %v1546 = vrcp.pop %v1426
    %v1547 = vrcp.pop %v1427
    %v1548 = vrcp.pop %v1428
    %v1549 = vrcp.pop %v1429
    %v1550 = vrcp.pop %v1430
    %v1551 = vrcp.pop %v1431
    %v1552 = vrcp.pop %v1432
    %v1553 = vrcp.pop %v1433
    %v1554 = vrcp.pop %v1434
    %v1555 = vrcp.pop %v1435
    %v1556 = vrcp.pop %v1436
    %v1557 = vrcp.pop %v1437
    %v1558 = vrcp.pop %v1438
    %v1559 = vrcp.pop %v1439
    %v1560 = vrcp.pop %v1440
    %v1561 = vrcp.pop %v1441
    %v1562 = vrcp.pop %v1442
    %v1563 = vrcp.pop %v1443
    %v1564 = vrcp.pop %v1444
    %v1565 = vrcp.pop %v1445
    %v1566 = vrcp.pop %v1446
    %v1567 = vrcp.pop %v1447
    %v1568 = vrcp.pop %v1448
    %v1569 = vrcp.pop %v1449
    %v1570 = vrcp.pop %v1450
    %v1571 = vrcp.pop %v1451
    %v1572 = vrcp.pop %v1452
    %v1573 = vrcp.pop %v1453
    %v1574 = vrcp.pop %v1454
    %v1575 = vrcp.pop %v1455
    %v1576 = vrcp.pop %v1456
    %v1577 = vrcp.pop %v1457
    %v1578 = vrcp.pop %v1458
    %v1579 = vrcp.pop %v1459
    %v1580 = vrcp.pop %v1460
    %v1581 = vrcp.pop %v1461
    %v1582 = vrcp.pop %v1462
    %v1583 = vrcp.pop %v1463
    %v1584 = vrcp.pop %v1464
    %v1585 = vrcp.pop %v1465
    %v1586 = vrcp.pop %v1466
    %v1587 = vrcp.pop %v1467
    %v1588 = vrcp.pop %v1468
    %v1589 = vrcp.pop %v1469
    %v1590 = vrcp.pop %v1470
    %v1591 = vrcp.pop %v1471
    %v1592 = vrcp.pop %v1472
    %v1593 = vrcp.pop %v1473
    %v1594 = vrcp.pop %v1474
    %v1595 = vrcp.pop %v1475
    %v1596 = vrcp.pop %v1476
    %v1597 = vrcp.pop %v1477
    %v1598 = vrcp.pop %v1478
    %v1599 = vrcp.pop %v1479
    %v1600 = vrcp.pop %v1480
    %v1601 = vrcp.pop %v1481
    %v1602 = vrcp.pop %v1482
    %v1603 = vrcp.pop %v1483
    %v1604 = vrcp.pop %v1484
    %v1605 = vrcp.pop %v1485
    %v1606 = vrcp.pop %v1486
    %v1607 = vrcp.pop %v1487
    %v1608 = vrcp.pop %v1488
    %v1609 = vrcp.pop %v1489
    %v1610 = vrcp.pop %v1490
    %v1611 = vmul.f32 %v1491, 2.0
    %v1612 = vmul.f32 %v1492, 2.0
    %v1613 = vmul.f32 %v1493, 2.0
    %v1614 = vmul.f32 %v1494, 2.0
    %v1615 = vmul.f32 %v1495, 2.0
    %v1616 = vmul.f32 %v1496, 2.0
    %v1617 = vmul.f32 %v1497, 2.0
    %v1618 = vmul.f32 %v1498, 2.0
    %v1619 = vmul.f32 %v1499, 2.0
    %v1620 = vmul.f32 %v1500, 2.0
    %v1621 = vmul.f32 %v1501, 2.0
    %v1622 = vmul.f32 %v1502, 2.0
    %v1623 = vmul.f32 %v1503, 2.0
    %v1624 = vmul.f32 %v1504, 2.0
    %v1625 = vmul.f32 %v1505, 2.0
    %v1626 = vmul.f32 %v1506, 2.0
    %v1627 = vmul.f32 %v1507, 2.0
    %v1628 = vmul.f32 %v1508, 2.0
    %v1629 = vmul.f32 %v1509, 2.0
    %v1630 = vmul.f32 %v1510, 2.0
    %v1631 = vmul.f32 %v1511, 2.0
    %v1632 = vmul.f32 %v1512, 2.0
    %v1633 = vmul.f32 %v1513, 2.0
    %v1634 = vmul.f32 %v1514, 2.0
    %v1635 = vmul.f32 %v1515, 2.0
    %v1636 = vmul.f32 %v1516, 2.0
    %v1637 = vmul.f32 %v1517, 2.0
    %v1638 = vmul.f32 %v1518, 2.0
    %v1639 = vmul.f32 %v1519, 2.0
    %v1640 = vmul.f32 %v1520, 2.0
    %v1641 = vmul.f32 %v1521, 2.0
    %v1642 = vmul.f32 %v1522, 2.0
    %v1643 = vmul.f32 %v1523, 2.0
    %v1644 = vmul.f32 %v1524, 2.0
    %v1645 = vmul.f32 %v1525, 2.0
    %v1646 = vmul.f32 %v1526, 2.0
    %v1647 = vmul.f32 %v1527, 2.0
    %v1648 = vmul.f32 %v1528, 2.0
    %v1649 = vmul.f32 %v1529, 2.0
    %v1650 = vmul.f32 %v1530, 2.0
    %v1651 = vmul.f32 %v1531, 2.0
    %v1652 = vmul.f32 %v1532, 2.0
    %v1653 = vmul.f32 %v1533, 2.0
    %v1654 = vmul.f32 %v1534, 2.0
    %v1655 = vmul.f32 %v1535, 2.0
    %v1656 = vmul.f32 %v1536, 2.0
    %v1657 = vmul.f32 %v1537, 2.0
    %v1658 = vmul.f32 %v1538, 2.0
    %v1659 = vmul.f32 %v1539, 2.0
    %v1660 = vmul.f32 %v1540, 2.0
    %v1661 = vmul.f32 %v1541, 2.0
    %v1662 = vmul.f32 %v1542, 2.0
    %v1663 = vmul.f32 %v1543, 2.0
    %v1664 = vmul.f32 %v1544, 2.0
    %v1665 = vmul.f32 %v1545, 2.0
    %v1666 = vmul.f32 %v1546, 2.0
    %v1667 = vmul.f32 %v1547, 2.0
    %v1668 = vmul.f32 %v1548, 2.0
    %v1669 = vmul.f32 %v1549, 2.0
    %v1670 = vmul.f32 %v1550, 2.0
    %v1671 = vmul.f32 %v1551, 2.0
    %v1672 = vmul.f32 %v1552, 2.0
    %v1673 = vmul.f32 %v1553, 2.0
    %v1674 = vmul.f32 %v1554, 2.0
    %v1675 = vmul.f32 %v1555, 2.0
    %v1676 = vmul.f32 %v1556, 2.0
    %v1677 = vmul.f32 %v1557, 2.0
    %v1678 = vmul.f32 %v1558, 2.0
    %v1679 = vmul.f32 %v1559, 2.0
    %v1680 = vmul.f32 %v1560, 2.0
    %v1681 = vmul.f32 %v1561, 2.0
    %v1682 = vmul.f32 %v1562, 2.0
    %v1683 = vmul.f32 %v1563, 2.0
    %v1684 = vmul.f32 %v1564, 2.0
    %v1685 = vmul.f32 %v1565, 2.0
    %v1686 = vmul.f32 %v1566, 2.0
    %v1687 = vmul.f32 %v1567, 2.0
    %v1688 = vmul.f32 %v1568, 2.0
    %v1689 = vmul.f32 %v1569, 2.0
    %v1690 = vmul.f32 %v1570, 2.0
    %v1691 = vmul.f32 %v1571, 2.0
    %v1692 = vmul.f32 %v1572, 2.0
    %v1693 = vmul.f32 %v1573, 2.0
    %v1694 = vmul.f32 %v1574, 2.0
    %v1695 = vmul.f32 %v1575, 2.0
    %v1696 = vmul.f32 %v1576, 2.0
    %v1697 = vmul.f32 %v1577, 2.0
    %v1698 = vmul.f32 %v1578, 2.0
    %v1699 = vmul.f32 %v1579, 2.0
    %v1700 = vmul.f32 %v1580, 2.0
    %v1701 = vmul.f32 %v1581, 2.0
    %v1702 = vmul.f32 %v1582, 2.0
    %v1703 = vmul.f32 %v1583, 2.0
    %v1704 = vmul.f32 %v1584, 2.0
    %v1705 = vmul.f32 %v1585, 2.0
    %v1706 = vmul.f32 %v1586, 2.0
    %v1707 = vmul.f32 %v1587, 2.0
    %v1708 = vmul.f32 %v1588, 2.0
    %v1709 = vmul.f32 %v1589, 2.0
    %v1710 = vmul.f32 %v1590, 2.0
    %v1711 = vmul.f32 %v1591, 2.0
    %v1712 = vmul.f32 %v1592, 2.0
    %v1713 = vmul.f32 %v1593, 2.0
    %v1714 = vmul.f32 %v1594, 2.0
    %v1715 = vmul.f32 %v1595, 2.0
    %v1716 = vmul.f32 %v1596, 2.0
    %v1717 = vmul.f32 %v1597, 2.0
    %v1718 = vmul.f32 %v1598, 2.0
    %v1719 = vmul.f32 %v1599, 2.0
    %v1720 = vmul.f32 %v1600, 2.0
    %v1721 = vmul.f32 %v1601, 2.0
    %v1722 = vmul.f32 %v1602, 2.0
    %v1723 = vmul.f32 %v1603, 2.0
    %v1724 = vmul.f32 %v1604, 2.0
    %v1725 = vmul.f32 %v1605, 2.0
    %v1726 = vmul.f32 %v1606, 2.0
    %v1727 = vmul.f32 %v1607, 2.0
    %v1728 = vmul.f32 %v1608, 2.0
    %v1729 = vmul.f32 %v1609, 2.0
    %v1730 = vmul.f32 %v1610, 2.0
    %v1731 = vsub.f32 1.0, %v1611
    %v1732 = vsub.f32 1.0, %v1612
    %v1733 = vsub.f32 1.0, %v1613
    %v1734 = vsub.f32 1.0, %v1614
    %v1735 = vsub.f32 1.0, %v1615
    %v1736 = vsub.f32 1.0, %v1616
    %v1737 = vsub.f32 1.0, %v1617
    %v1738 = vsub.f32 1.0, %v1618
    %v1739 = vsub.f32 1.0, %v1619
    %v1740 = vsub.f32 1.0, %v1620
    %v1741 = vsub.f32 1.0, %v1621
    %v1742 = vsub.f32 1.0, %v1622
    %v1743 = vsub.f32 1.0, %v1623
    %v1744 = vsub.f32 1.0, %v1624
    %v1745 = vsub.f32 1.0, %v1625
    %v1746 = vsub.f32 1.0, %v1626
    %v1747 = vsub.f32 1.0, %v1627
    %v1748 = vsub.f32 1.0, %v1628
    %v1749 = vsub.f32 1.0, %v1629
    %v1750 = vsub.f32 1.0, %v1630
    %v1751 = vsub.f32 1.0, %v1631
    %v1752 = vsub.f32 1.0, %v1632
    %v1753 = vsub.f32 1.0, %v1633
    %v1754 = vsub.f32 1.0, %v1634
    %v1755 = vsub.f32 1.0, %v1635
    %v1756 = vsub.f32 1.0, %v1636
    %v1757 = vsub.f32 1.0, %v1637
    %v1758 = vsub.f32 1.0, %v1638
    %v1759 = vsub.f32 1.0, %v1639
    %v1760 = vsub.f32 1.0, %v1640
    %v1761 = vsub.f32 1.0, %v1641
    %v1762 = vsub.f32 1.0, %v1642
    %v1763 = vsub.f32 1.0, %v1643
    %v1764 = vsub.f32 1.0, %v1644
    %v1765 = vsub.f32 1.0, %v1645
    %v1766 = vsub.f32 1.0, %v1646
    %v1767 = vsub.f32 1.0, %v1647
    %v1768 = vsub.f32 1.0, %v1648
    %v1769 = vsub.f32 1.0, %v1649
    %v1770 = vsub.f32 1.0, %v1650
    %v1771 = vsub.f32 1.0, %v1651
    %v1772 = vsub.f32 1.0, %v1652
    %v1773 = vsub.f32 1.0, %v1653
    %v1774 = vsub.f32 1.0, %v1654
    %v1775 = vsub.f32 1.0, %v1655
    %v1776 = vsub.f32 1.0, %v1656
    %v1777 = vsub.f32 1.0, %v1657
    %v1778 = vsub.f32 1.0, %v1658
    %v1779 = vsub.f32 1.0, %v1659
    %v1780 = vsub.f32 1.0, %v1660
    %v1781 = vsub.f32 1.0, %v1661
    %v1782 = vsub.f32 1.0, %v1662
    %v1783 = vsub.f32 1.0, %v1663
    %v1784 = vsub.f32 1.0, %v1664
    %v1785 = vsub.f32 1.0, %v1665
    %v1786 = vsub.f32 1.0, %v1666
    %v1787 = vsub.f32 1.0, %v1667
    %v1788 = vsub.f32 1.0, %v1668
    %v1789 = vsub.f32 1.0, %v1669
    %v1790 = vsub.f32 1.0, %v1670
    %v1791 = vsub.f32 1.0, %v1671
    %v1792 = vsub.f32 1.0, %v1672
    %v1793 = vsub.f32 1.0, %v1673
    %v1794 = vsub.f32 1.0, %v1674
    %v1795 = vsub.f32 1.0, %v1675
    %v1796 = vsub.f32 1.0, %v1676
    %v1797 = vsub.f32 1.0, %v1677
    %v1798 = vsub.f32 1.0, %v1678
    %v1799 = vsub.f32 1.0, %v1679
    %v1800 = vsub.f32 1.0, %v1680
    %v1801 = vsub.f32 1.0, %v1681
    %v1802 = vsub.f32 1.0, %v1682
    %v1803 = vsub.f32 1.0, %v1683
    %v1804 = vsub.f32 1.0, %v1684
    %v1805 = vsub.f32 1.0, %v1685
    %v1806 = vsub.f32 1.0, %v1686
    %v1807 = vsub.f32 1.0, %v1687
    %v1808 = vsub.f32 1.0, %v1688
    %v1809 = vsub.f32 1.0, %v1689
    %v1810 = vsub.f32 1.0, %v1690
    %v1811 = vsub.f32 1.0, %v1691
    %v1812 = vsub.f32 1.0, %v1692
    %v1813 = vsub.f32 1.0, %v1693
    %v1814 = vsub.f32 1.0, %v1694
    %v1815 = vsub.f32 1.0, %v1695
    %v1816 = vsub.f32 1.0, %v1696
    %v1817 = vsub.f32 1.0, %v1697
    %v1818 = vsub.f32 1.0, %v1698
    %v1819 = vsub.f32 1.0, %v1699
    %v1820 = vsub.f32 1.0, %v1700
    %v1821 = vsub.f32 1.0, %v1701
    %v1822 = vsub.f32 1.0, %v1702
    %v1823 = vsub.f32 1.0, %v1703
    %v1824 = vsub.f32 1.0, %v1704
    %v1825 = vsub.f32 1.0, %v1705
    %v1826 = vsub.f32 1.0, %v1706
    %v1827 = vsub.f32 1.0, %v1707
    %v1828 = vsub.f32 1.0, %v1708
    %v1829 = vsub.f32 1.0, %v1709
    %v1830 = vsub.f32 1.0, %v1710
    %v1831 = vsub.f32 1.0, %v1711
    %v1832 = vsub.f32 1.0, %v1712
    %v1833 = vsub.f32 1.0, %v1713
    %v1834 = vsub.f32 1.0, %v1714
    %v1835 = vsub.f32 1.0, %v1715
    %v1836 = vsub.f32 1.0, %v1716
    %v1837 = vsub.f32 1.0, %v1717
    %v1838 = vsub.f32 1.0, %v1718
    %v1839 = vsub.f32 1.0, %v1719
    %v1840 = vsub.f32 1.0, %v1720
    %v1841 = vsub.f32 1.0, %v1721
    %v1842 = vsub.f32 1.0, %v1722
    %v1843 = vsub.f32 1.0, %v1723
    %v1844 = vsub.f32 1.0, %v1724
    %v1845 = vsub.f32 1.0, %v1725
    %v1846 = vsub.f32 1.0, %v1726
    %v1847 = vsub.f32 1.0, %v1727
    %v1848 = vsub.f32 1.0, %v1728
    %v1849 = vsub.f32 1.0, %v1729
    %v1850 = vsub.f32 1.0, %v1730
    %v1851 = vmul.f32 %v532, %v1731
    %v1852 = vmul.f32 %v535, %v1732
    %v1853 = vmul.f32 %v538, %v1733
    %v1854 = vmul.f32 %v541, %v1734
    %v1855 = vmul.f32 %v544, %v1735
    %v1856 = vmul.f32 %v547, %v1736
    %v1857 = vmul.f32 %v550, %v1737
    %v1858 = vmul.f32 %v553, %v1738
    %v1859 = vmul.f32 %v556, %v1739
    %v1860 = vmul.f32 %v559, %v1740
    %v1861 = vmul.f32 %v562, %v1741
    %v1862 = vmul.f32 %v565, %v1742
    %v1863 = vmul.f32 %v568, %v1743
    %v1864 = vmul.f32 %v571, %v1744
    %v1865 = vmul.f32 %v574, %v1745
    %v1866 = vmul.f32 %v577, %v1746
    %v1867 = vmul.f32 %v580, %v1747
    %v1868 = vmul.f32 %v583, %v1748
    %v1869 = vmul.f32 %v586, %v1749
    %v1870 = vmul.f32 %v589, %v1750
    %v1871 = vmul.f32 %v592, %v1751
    %v1872 = vmul.f32 %v595, %v1752
    %v1873 = vmul.f32 %v598, %v1753
    %v1874 = vmul.f32 %v601, %v1754
    %v1875 = vmul.f32 %v604, %v1755
    %v1876 = vmul.f32 %v607, %v1756
    %v1877 = vmul.f32 %v610, %v1757
    %v1878 = vmul.f32 %v613, %v1758
    %v1879 = vmul.f32 %v616, %v1759
    %v1880 = vmul.f32 %v619, %v1760
    %v1881 = vmul.f32 %v622, %v1761
    %v1882 = vmul.f32 %v625, %v1762
    %v1883 = vmul.f32 %v628, %v1763
    %v1884 = vmul.f32 %v631, %v1764
    %v1885 = vmul.f32 %v634, %v1765
    %v1886 = vmul.f32 %v637, %v1766
    %v1887 = vmul.f32 %v640, %v1767
    %v1888 = vmul.f32 %v643, %v1768
    %v1889 = vmul.f32 %v646, %v1769
    %v1890 = vmul.f32 %v649, %v1770
    %v1891 = vmul.f32 %v652, %v1771
    %v1892 = vmul.f32 %v655, %v1772
    %v1893 = vmul.f32 %v658, %v1773
    %v1894 = vmul.f32 %v661, %v1774
    %v1895 = vmul.f32 %v664, %v1775
    %v1896 = vmul.f32 %v667, %v1776
    %v1897 = vmul.f32 %v670, %v1777
    %v1898 = vmul.f32 %v673, %v1778
    %v1899 = vmul.f32 %v676, %v1779
    %v1900 = vmul.f32 %v679, %v1780
    %v1901 = vmul.f32 %v682, %v1781
    %v1902 = vmul.f32 %v685, %v1782
    %v1903 = vmul.f32 %v688, %v1783
    %v1904 = vmul.f32 %v691, %v1784
    %v1905 = vmul.f32 %v694, %v1785
    %v1906 = vmul.f32 %v697, %v1786
    %v1907 = vmul.f32 %v700, %v1787
    %v1908 = vmul.f32 %v703, %v1788
    %v1909 = vmul.f32 %v706, %v1789
    %v1910 = vmul.f32 %v709, %v1790
    %v1911 = vmul.f32 %v712, %v1791
    %v1912 = vmul.f32 %v715, %v1792
    %v1913 = vmul.f32 %v718, %v1793
    %v1914 = vmul.f32 %v721, %v1794
    %v1915 = vmul.f32 %v724, %v1795
    %v1916 = vmul.f32 %v727, %v1796
    %v1917 = vmul.f32 %v730, %v1797
    %v1918 = vmul.f32 %v733, %v1798
    %v1919 = vmul.f32 %v736, %v1799
    %v1920 = vmul.f32 %v739, %v1800
    %v1921 = vmul.f32 %v742, %v1801
    %v1922 = vmul.f32 %v745, %v1802
    %v1923 = vmul.f32 %v748, %v1803
    %v1924 = vmul.f32 %v751, %v1804
    %v1925 = vmul.f32 %v754, %v1805
    %v1926 = vmul.f32 %v757, %v1806
    %v1927 = vmul.f32 %v760, %v1807
    %v1928 = vmul.f32 %v763, %v1808
    %v1929 = vmul.f32 %v766, %v1809
    %v1930 = vmul.f32 %v769, %v1810
    %v1931 = vmul.f32 %v772, %v1811
    %v1932 = vmul.f32 %v775, %v1812
    %v1933 = vmul.f32 %v778, %v1813
    %v1934 = vmul.f32 %v781, %v1814
    %v1935 = vmul.f32 %v784, %v1815
    %v1936 = vmul.f32 %v787, %v1816
    %v1937 = vmul.f32 %v790, %v1817
    %v1938 = vmul.f32 %v793, %v1818
    %v1939 = vmul.f32 %v796, %v1819
    %v1940 = vmul.f32 %v799, %v1820
    %v1941 = vmul.f32 %v802, %v1821
    %v1942 = vmul.f32 %v805, %v1822
    %v1943 = vmul.f32 %v808, %v1823
    %v1944 = vmul.f32 %v811, %v1824
    %v1945 = vmul.f32 %v814, %v1825
    %v1946 = vmul.f32 %v817, %v1826
    %v1947 = vmul.f32 %v820, %v1827
    %v1948 = vmul.f32 %v823, %v1828
    %v1949 = vmul.f32 %v826, %v1829
    %v1950 = vmul.f32 %v829, %v1830
    %v1951 = vmul.f32 %v832, %v1831
    %v1952 = vmul.f32 %v835, %v1832
    %v1953 = vmul.f32 %v838, %v1833
    %v1954 = vmul.f32 %v841, %v1834
    %v1955 = vmul.f32 %v844, %v1835
    %v1956 = vmul.f32 %v847, %v1836
    %v1957 = vmul.f32 %v850, %v1837
    %v1958 = vmul.f32 %v853, %v1838
    %v1959 = vmul.f32 %v856, %v1839
    %v1960 = vmul.f32 %v859, %v1840
    %v1961 = vmul.f32 %v862, %v1841
    %v1962 = vmul.f32 %v865, %v1842
    %v1963 = vmul.f32 %v868, %v1843
    %v1964 = vmul.f32 %v871, %v1844
    %v1965 = vmul.f32 %v874, %v1845
    %v1966 = vmul.f32 %v877, %v1846
    %v1967 = vmul.f32 %v880, %v1847
    %v1968 = vmul.f32 %v883, %v1848
    %v1969 = vmul.f32 %v886, %v1849
    %v1970 = vmul.f32 %v889, %v1850
    %v1971 = vld [vmem:[%s3] sm:$0xff]
    %v1972 = vld [vmem:[%s3 + $0x8] sm:$0xff]
    %v1973 = vld [vmem:[%s3 + $0x10] sm:$0xff]
    %v1974 = vld [vmem:[%s3 + $0x18] sm:$0xff]
    %v1975 = vld [vmem:[%s3 + $0x20] sm:$0xff]
    %v1976 = vld [vmem:[%s3 + $0x28] sm:$0xff]
    %v1977 = vld [vmem:[%s3 + $0x30] sm:$0xff]
    %v1978 = vld [vmem:[%s3 + $0x38] sm:$0xff]
    %v1979 = vld [vmem:[%s3 + $0x40] sm:$0xff]
    %v1980 = vld [vmem:[%s3 + $0x48] sm:$0xff]
    %v1981 = vld [vmem:[%s3 + $0x50] sm:$0xff]
    %v1982 = vld [vmem:[%s3 + $0x58] sm:$0xff]
    %v1983 = vld [vmem:[%s3 + $0x60] sm:$0xff]
    %v1984 = vld [vmem:[%s3 + $0x68] sm:$0xff]
    %v1985 = vld [vmem:[%s3 + $0x70] sm:$0xff]
    %v1986 = vld [vmem:[%s3 + $0x78] sm:$0xff]
    %v1987 = vld [vmem:[%s4] sm:$0x1]
    %v1989 = vperm.slane %v1987, 0
    %1991 = vmatpush.msra.mxu0 %v1986
    %1992 = vmatpush.msra.mxu0 %v1985
    %1993 = vmatpush.msra.mxu0 %v1984
    %1994 = vmatpush.msra.mxu0 %v1983
    %1995 = vmatpush.msra.mxu0 %v1982
    %1996 = vmatpush.msra.mxu0 %v1981
    %1997 = vmatpush.msra.mxu0 %v1980
    %1998 = vmatpush.msra.mxu0 %v1979
    %1999 = vmatpush.msra.mxu0 %v1978
    %2000 = vmatpush.msra.mxu0 %v1977
    %2001 = vmatpush.msra.mxu0 %v1976
    %2002 = vmatpush.msra.mxu0 %v1975
    %2003 = vmatpush.msra.mxu0 %v1974
    %2004 = vmatpush.msra.mxu0 %v1973
    %2005 = vmatpush.msra.mxu0 %v1972
    %2006 = vmatpush.msra.mxu0 %v1971
    %2007 = vmatmul.f32.gmra.mxu0 %v1851
    %v2008 = vpop.f32.mrf.mxu0
    %v2009 = vadd.f32 %v1989, %v2008
    %2010 = vmatmul.f32.gmra.mxu0 %v1852
    %v2011 = vpop.f32.mrf.mxu0
    %v2012 = vadd.f32 %v1989, %v2011
    %2013 = vmatmul.f32.gmra.mxu0 %v1853
    %v2014 = vpop.f32.mrf.mxu0
    %v2015 = vadd.f32 %v1989, %v2014
    %2016 = vmatmul.f32.gmra.mxu0 %v1854
    %v2017 = vpop.f32.mrf.mxu0
    %v2018 = vadd.f32 %v1989, %v2017
    %2019 = vmatmul.f32.gmra.mxu0 %v1855
    %v2020 = vpop.f32.mrf.mxu0
    %v2021 = vadd.f32 %v1989, %v2020
    %2022 = vmatmul.f32.gmra.mxu0 %v1856
    %v2023 = vpop.f32.mrf.mxu0
    %v2024 = vadd.f32 %v1989, %v2023
    %2025 = vmatmul.f32.gmra.mxu0 %v1857
    %v2026 = vpop.f32.mrf.mxu0
    %v2027 = vadd.f32 %v1989, %v2026
    %2028 = vmatmul.f32.gmra.mxu0 %v1858
    %v2029 = vpop.f32.mrf.mxu0
    %v2030 = vadd.f32 %v1989, %v2029
    %2031 = vmatmul.f32.gmra.mxu0 %v1859
    %v2032 = vpop.f32.mrf.mxu0
    %v2033 = vadd.f32 %v1989, %v2032
    %2034 = vmatmul.f32.gmra.mxu0 %v1860
    %v2035 = vpop.f32.mrf.mxu0
    %v2036 = vadd.f32 %v1989, %v2035
    %2037 = vmatmul.f32.gmra.mxu0 %v1861
    %v2038 = vpop.f32.mrf.mxu0
    %v2039 = vadd.f32 %v1989, %v2038
    %2040 = vmatmul.f32.gmra.mxu0 %v1862
    %v2041 = vpop.f32.mrf.mxu0
    %v2042 = vadd.f32 %v1989, %v2041
    %2043 = vmatmul.f32.gmra.mxu0 %v1863
    %v2044 = vpop.f32.mrf.mxu0
    %v2045 = vadd.f32 %v1989, %v2044
    %2046 = vmatmul.f32.gmra.mxu0 %v1864
    %v2047 = vpop.f32.mrf.mxu0
    %v2048 = vadd.f32 %v1989, %v2047
    %2049 = vmatmul.f32.gmra.mxu0 %v1865
    %v2050 = vpop.f32.mrf.mxu0
    %v2051 = vadd.f32 %v1989, %v2050
    %2052 = vmatmul.f32.gmra.mxu0 %v1866
    %v2053 = vpop.f32.mrf.mxu0
    %v2054 = vadd.f32 %v1989, %v2053
    %2055 = vmatmul.f32.gmra.mxu0 %v1867
    %v2056 = vpop.f32.mrf.mxu0
    %v2057 = vadd.f32 %v1989, %v2056
    %2058 = vmatmul.f32.gmra.mxu0 %v1868
    %v2059 = vpop.f32.mrf.mxu0
    %v2060 = vadd.f32 %v1989, %v2059
    %2061 = vmatmul.f32.gmra.mxu0 %v1869
    %v2062 = vpop.f32.mrf.mxu0
    %v2063 = vadd.f32 %v1989, %v2062
    %2064 = vmatmul.f32.gmra.mxu0 %v1870
    %v2065 = vpop.f32.mrf.mxu0
    %v2066 = vadd.f32 %v1989, %v2065
    %2067 = vmatmul.f32.gmra.mxu0 %v1871
    %v2068 = vpop.f32.mrf.mxu0
    %v2069 = vadd.f32 %v1989, %v2068
    %2070 = vmatmul.f32.gmra.mxu0 %v1872
    %v2071 = vpop.f32.mrf.mxu0
    %v2072 = vadd.f32 %v1989, %v2071
    %2073 = vmatmul.f32.gmra.mxu0 %v1873
    %v2074 = vpop.f32.mrf.mxu0
    %v2075 = vadd.f32 %v1989, %v2074
    %2076 = vmatmul.f32.gmra.mxu0 %v1874
    %v2077 = vpop.f32.mrf.mxu0
    %v2078 = vadd.f32 %v1989, %v2077
    %2079 = vmatmul.f32.gmra.mxu0 %v1875
    %v2080 = vpop.f32.mrf.mxu0
    %v2081 = vadd.f32 %v1989, %v2080
    %2082 = vmatmul.f32.gmra.mxu0 %v1876
    %v2083 = vpop.f32.mrf.mxu0
    %v2084 = vadd.f32 %v1989, %v2083
    %2085 = vmatmul.f32.gmra.mxu0 %v1877
    %v2086 = vpop.f32.mrf.mxu0
    %v2087 = vadd.f32 %v1989, %v2086
    %2088 = vmatmul.f32.gmra.mxu0 %v1878
    %v2089 = vpop.f32.mrf.mxu0
    %v2090 = vadd.f32 %v1989, %v2089
    %2091 = vmatmul.f32.gmra.mxu0 %v1879
    %v2092 = vpop.f32.mrf.mxu0
    %v2093 = vadd.f32 %v1989, %v2092
    %2094 = vmatmul.f32.gmra.mxu0 %v1880
    %v2095 = vpop.f32.mrf.mxu0
    %v2096 = vadd.f32 %v1989, %v2095
    %2097 = vmatmul.f32.gmra.mxu0 %v1881
    %v2098 = vpop.f32.mrf.mxu0
    %v2099 = vadd.f32 %v1989, %v2098
    %2100 = vmatmul.f32.gmra.mxu0 %v1882
    %v2101 = vpop.f32.mrf.mxu0
    %v2102 = vadd.f32 %v1989, %v2101
    %2103 = vmatmul.f32.gmra.mxu0 %v1883
    %v2104 = vpop.f32.mrf.mxu0
    %v2105 = vadd.f32 %v1989, %v2104
    %2106 = vmatmul.f32.gmra.mxu0 %v1884
    %v2107 = vpop.f32.mrf.mxu0
    %v2108 = vadd.f32 %v1989, %v2107
    %2109 = vmatmul.f32.gmra.mxu0 %v1885
    %v2110 = vpop.f32.mrf.mxu0
    %v2111 = vadd.f32 %v1989, %v2110
    %2112 = vmatmul.f32.gmra.mxu0 %v1886
    %v2113 = vpop.f32.mrf.mxu0
    %v2114 = vadd.f32 %v1989, %v2113
    %2115 = vmatmul.f32.gmra.mxu0 %v1887
    %v2116 = vpop.f32.mrf.mxu0
    %v2117 = vadd.f32 %v1989, %v2116
    %2118 = vmatmul.f32.gmra.mxu0 %v1888
    %v2119 = vpop.f32.mrf.mxu0
    %v2120 = vadd.f32 %v1989, %v2119
    %2121 = vmatmul.f32.gmra.mxu0 %v1889
    %v2122 = vpop.f32.mrf.mxu0
    %v2123 = vadd.f32 %v1989, %v2122
    %2124 = vmatmul.f32.gmra.mxu0 %v1890
    %v2125 = vpop.f32.mrf.mxu0
    %v2126 = vadd.f32 %v1989, %v2125
    %2127 = vmatmul.f32.gmra.mxu0 %v1891
    %v2128 = vpop.f32.mrf.mxu0
    %v2129 = vadd.f32 %v1989, %v2128
    %2130 = vmatmul.f32.gmra.mxu0 %v1892
    %v2131 = vpop.f32.mrf.mxu0
    %v2132 = vadd.f32 %v1989, %v2131
    %2133 = vmatmul.f32.gmra.mxu0 %v1893
    %v2134 = vpop.f32.mrf.mxu0
    %v2135 = vadd.f32 %v1989, %v2134
    %2136 = vmatmul.f32.gmra.mxu0 %v1894
    %v2137 = vpop.f32.mrf.mxu0
    %v2138 = vadd.f32 %v1989, %v2137
    %2139 = vmatmul.f32.gmra.mxu0 %v1895
    %v2140 = vpop.f32.mrf.mxu0
    %v2141 = vadd.f32 %v1989, %v2140
    %2142 = vmatmul.f32.gmra.mxu0 %v1896
    %v2143 = vpop.f32.mrf.mxu0
    %v2144 = vadd.f32 %v1989, %v2143
    %2145 = vmatmul.f32.gmra.mxu0 %v1897
    %v2146 = vpop.f32.mrf.mxu0
    %v2147 = vadd.f32 %v1989, %v2146
    %2148 = vmatmul.f32.gmra.mxu0 %v1898
    %v2149 = vpop.f32.mrf.mxu0
    %v2150 = vadd.f32 %v1989, %v2149
    %2151 = vmatmul.f32.gmra.mxu0 %v1899
    %v2152 = vpop.f32.mrf.mxu0
    %v2153 = vadd.f32 %v1989, %v2152
    %2154 = vmatmul.f32.gmra.mxu0 %v1900
    %v2155 = vpop.f32.mrf.mxu0
    %v2156 = vadd.f32 %v1989, %v2155
    %2157 = vmatmul.f32.gmra.mxu0 %v1901
    %v2158 = vpop.f32.mrf.mxu0
    %v2159 = vadd.f32 %v1989, %v2158
    %2160 = vmatmul.f32.gmra.mxu0 %v1902
    %v2161 = vpop.f32.mrf.mxu0
    %v2162 = vadd.f32 %v1989, %v2161
    %2163 = vmatmul.f32.gmra.mxu0 %v1903
    %v2164 = vpop.f32.mrf.mxu0
    %v2165 = vadd.f32 %v1989, %v2164
    %2166 = vmatmul.f32.gmra.mxu0 %v1904
    %v2167 = vpop.f32.mrf.mxu0
    %v2168 = vadd.f32 %v1989, %v2167
    %2169 = vmatmul.f32.gmra.mxu0 %v1905
    %v2170 = vpop.f32.mrf.mxu0
    %v2171 = vadd.f32 %v1989, %v2170
    %2172 = vmatmul.f32.gmra.mxu0 %v1906
    %v2173 = vpop.f32.mrf.mxu0
    %v2174 = vadd.f32 %v1989, %v2173
    %2175 = vmatmul.f32.gmra.mxu0 %v1907
    %v2176 = vpop.f32.mrf.mxu0
    %v2177 = vadd.f32 %v1989, %v2176
    %2178 = vmatmul.f32.gmra.mxu0 %v1908
    %v2179 = vpop.f32.mrf.mxu0
    %v2180 = vadd.f32 %v1989, %v2179
    %2181 = vmatmul.f32.gmra.mxu0 %v1909
    %v2182 = vpop.f32.mrf.mxu0
    %v2183 = vadd.f32 %v1989, %v2182
    %2184 = vmatmul.f32.gmra.mxu0 %v1910
    %v2185 = vpop.f32.mrf.mxu0
    %v2186 = vadd.f32 %v1989, %v2185
    %2187 = vmatmul.f32.gmra.mxu0 %v1911
    %v2188 = vpop.f32.mrf.mxu0
    %v2189 = vadd.f32 %v1989, %v2188
    %2190 = vmatmul.f32.gmra.mxu0 %v1912
    %v2191 = vpop.f32.mrf.mxu0
    %v2192 = vadd.f32 %v1989, %v2191
    %2193 = vmatmul.f32.gmra.mxu0 %v1913
    %v2194 = vpop.f32.mrf.mxu0
    %v2195 = vadd.f32 %v1989, %v2194
    %2196 = vmatmul.f32.gmra.mxu0 %v1914
    %v2197 = vpop.f32.mrf.mxu0
    %v2198 = vadd.f32 %v1989, %v2197
    %2199 = vmatmul.f32.gmra.mxu0 %v1915
    %v2200 = vpop.f32.mrf.mxu0
    %v2201 = vadd.f32 %v1989, %v2200
    %2202 = vmatmul.f32.gmra.mxu0 %v1916
    %v2203 = vpop.f32.mrf.mxu0
    %v2204 = vadd.f32 %v1989, %v2203
    %2205 = vmatmul.f32.gmra.mxu0 %v1917
    %v2206 = vpop.f32.mrf.mxu0
    %v2207 = vadd.f32 %v1989, %v2206
    %2208 = vmatmul.f32.gmra.mxu0 %v1918
    %v2209 = vpop.f32.mrf.mxu0
    %v2210 = vadd.f32 %v1989, %v2209
    %2211 = vmatmul.f32.gmra.mxu0 %v1919
    %v2212 = vpop.f32.mrf.mxu0
    %v2213 = vadd.f32 %v1989, %v2212
    %2214 = vmatmul.f32.gmra.mxu0 %v1920
    %v2215 = vpop.f32.mrf.mxu0
    %v2216 = vadd.f32 %v1989, %v2215
    %2217 = vmatmul.f32.gmra.mxu0 %v1921
    %v2218 = vpop.f32.mrf.mxu0
    %v2219 = vadd.f32 %v1989, %v2218
    %2220 = vmatmul.f32.gmra.mxu0 %v1922
    %v2221 = vpop.f32.mrf.mxu0
    %v2222 = vadd.f32 %v1989, %v2221
    %2223 = vmatmul.f32.gmra.mxu0 %v1923
    %v2224 = vpop.f32.mrf.mxu0
    %v2225 = vadd.f32 %v1989, %v2224
    %2226 = vmatmul.f32.gmra.mxu0 %v1924
    %v2227 = vpop.f32.mrf.mxu0
    %v2228 = vadd.f32 %v1989, %v2227
    %2229 = vmatmul.f32.gmra.mxu0 %v1925
    %v2230 = vpop.f32.mrf.mxu0
    %v2231 = vadd.f32 %v1989, %v2230
    %2232 = vmatmul.f32.gmra.mxu0 %v1926
    %v2233 = vpop.f32.mrf.mxu0
    %v2234 = vadd.f32 %v1989, %v2233
    %2235 = vmatmul.f32.gmra.mxu0 %v1927
    %v2236 = vpop.f32.mrf.mxu0
    %v2237 = vadd.f32 %v1989, %v2236
    %2238 = vmatmul.f32.gmra.mxu0 %v1928
    %v2239 = vpop.f32.mrf.mxu0
    %v2240 = vadd.f32 %v1989, %v2239
    %2241 = vmatmul.f32.gmra.mxu0 %v1929
    %v2242 = vpop.f32.mrf.mxu0
    %v2243 = vadd.f32 %v1989, %v2242
    %2244 = vmatmul.f32.gmra.mxu0 %v1930
    %v2245 = vpop.f32.mrf.mxu0
    %v2246 = vadd.f32 %v1989, %v2245
    %2247 = vmatmul.f32.gmra.mxu0 %v1931
    %v2248 = vpop.f32.mrf.mxu0
    %v2249 = vadd.f32 %v1989, %v2248
    %2250 = vmatmul.f32.gmra.mxu0 %v1932
    %v2251 = vpop.f32.mrf.mxu0
    %v2252 = vadd.f32 %v1989, %v2251
    %2253 = vmatmul.f32.gmra.mxu0 %v1933
    %v2254 = vpop.f32.mrf.mxu0
    %v2255 = vadd.f32 %v1989, %v2254
    %2256 = vmatmul.f32.gmra.mxu0 %v1934
    %v2257 = vpop.f32.mrf.mxu0
    %v2258 = vadd.f32 %v1989, %v2257
    %2259 = vmatmul.f32.gmra.mxu0 %v1935
    %v2260 = vpop.f32.mrf.mxu0
    %v2261 = vadd.f32 %v1989, %v2260
    %2262 = vmatmul.f32.gmra.mxu0 %v1936
    %v2263 = vpop.f32.mrf.mxu0
    %v2264 = vadd.f32 %v1989, %v2263
    %2265 = vmatmul.f32.gmra.mxu0 %v1937
    %v2266 = vpop.f32.mrf.mxu0
    %v2267 = vadd.f32 %v1989, %v2266
    %2268 = vmatmul.f32.gmra.mxu0 %v1938
    %v2269 = vpop.f32.mrf.mxu0
    %v2270 = vadd.f32 %v1989, %v2269
    %2271 = vmatmul.f32.gmra.mxu0 %v1939
    %v2272 = vpop.f32.mrf.mxu0
    %v2273 = vadd.f32 %v1989, %v2272
    %2274 = vmatmul.f32.gmra.mxu0 %v1940
    %v2275 = vpop.f32.mrf.mxu0
    %v2276 = vadd.f32 %v1989, %v2275
    %2277 = vmatmul.f32.gmra.mxu0 %v1941
    %v2278 = vpop.f32.mrf.mxu0
    %v2279 = vadd.f32 %v1989, %v2278
    %2280 = vmatmul.f32.gmra.mxu0 %v1942
    %v2281 = vpop.f32.mrf.mxu0
    %v2282 = vadd.f32 %v1989, %v2281
    %2283 = vmatmul.f32.gmra.mxu0 %v1943
    %v2284 = vpop.f32.mrf.mxu0
    %v2285 = vadd.f32 %v1989, %v2284
    %2286 = vmatmul.f32.gmra.mxu0 %v1944
    %v2287 = vpop.f32.mrf.mxu0
    %v2288 = vadd.f32 %v1989, %v2287
    %2289 = vmatmul.f32.gmra.mxu0 %v1945
    %v2290 = vpop.f32.mrf.mxu0
    %v2291 = vadd.f32 %v1989, %v2290
    %2292 = vmatmul.f32.gmra.mxu0 %v1946
    %v2293 = vpop.f32.mrf.mxu0
    %v2294 = vadd.f32 %v1989, %v2293
    %2295 = vmatmul.f32.gmra.mxu0 %v1947
    %v2296 = vpop.f32.mrf.mxu0
    %v2297 = vadd.f32 %v1989, %v2296
    %2298 = vmatmul.f32.gmra.mxu0 %v1948
    %v2299 = vpop.f32.mrf.mxu0
    %v2300 = vadd.f32 %v1989, %v2299
    %2301 = vmatmul.f32.gmra.mxu0 %v1949
    %v2302 = vpop.f32.mrf.mxu0
    %v2303 = vadd.f32 %v1989, %v2302
    %2304 = vmatmul.f32.gmra.mxu0 %v1950
    %v2305 = vpop.f32.mrf.mxu0
    %v2306 = vadd.f32 %v1989, %v2305
    %2307 = vmatmul.f32.gmra.mxu0 %v1951
    %v2308 = vpop.f32.mrf.mxu0
    %v2309 = vadd.f32 %v1989, %v2308
    %2310 = vmatmul.f32.gmra.mxu0 %v1952
    %v2311 = vpop.f32.mrf.mxu0
    %v2312 = vadd.f32 %v1989, %v2311
    %2313 = vmatmul.f32.gmra.mxu0 %v1953
    %v2314 = vpop.f32.mrf.mxu0
    %v2315 = vadd.f32 %v1989, %v2314
    %2316 = vmatmul.f32.gmra.mxu0 %v1954
    %v2317 = vpop.f32.mrf.mxu0
    %v2318 = vadd.f32 %v1989, %v2317
    %2319 = vmatmul.f32.gmra.mxu0 %v1955
    %v2320 = vpop.f32.mrf.mxu0
    %v2321 = vadd.f32 %v1989, %v2320
    %2322 = vmatmul.f32.gmra.mxu0 %v1956
    %v2323 = vpop.f32.mrf.mxu0
    %v2324 = vadd.f32 %v1989, %v2323
    %2325 = vmatmul.f32.gmra.mxu0 %v1957
    %v2326 = vpop.f32.mrf.mxu0
    %v2327 = vadd.f32 %v1989, %v2326
    %2328 = vmatmul.f32.gmra.mxu0 %v1958
    %v2329 = vpop.f32.mrf.mxu0
    %v2330 = vadd.f32 %v1989, %v2329
    %2331 = vmatmul.f32.gmra.mxu0 %v1959
    %v2332 = vpop.f32.mrf.mxu0
    %v2333 = vadd.f32 %v1989, %v2332
    %2334 = vmatmul.f32.gmra.mxu0 %v1960
    %v2335 = vpop.f32.mrf.mxu0
    %v2336 = vadd.f32 %v1989, %v2335
    %2337 = vmatmul.f32.gmra.mxu0 %v1961
    %v2338 = vpop.f32.mrf.mxu0
    %v2339 = vadd.f32 %v1989, %v2338
    %2340 = vmatmul.f32.gmra.mxu0 %v1962
    %v2341 = vpop.f32.mrf.mxu0
    %v2342 = vadd.f32 %v1989, %v2341
    %2343 = vmatmul.f32.gmra.mxu0 %v1963
    %v2344 = vpop.f32.mrf.mxu0
    %v2345 = vadd.f32 %v1989, %v2344
    %2346 = vmatmul.f32.gmra.mxu0 %v1964
    %v2347 = vpop.f32.mrf.mxu0
    %v2348 = vadd.f32 %v1989, %v2347
    %2349 = vmatmul.f32.gmra.mxu0 %v1965
    %v2350 = vpop.f32.mrf.mxu0
    %v2351 = vadd.f32 %v1989, %v2350
    %2352 = vmatmul.f32.gmra.mxu0 %v1966
    %v2353 = vpop.f32.mrf.mxu0
    %v2354 = vadd.f32 %v1989, %v2353
    %2355 = vmatmul.f32.gmra.mxu0 %v1967
    %v2356 = vpop.f32.mrf.mxu0
    %v2357 = vadd.f32 %v1989, %v2356
    %2358 = vmatmul.f32.gmra.mxu0 %v1968
    %v2359 = vpop.f32.mrf.mxu0
    %v2360 = vadd.f32 %v1989, %v2359
    %2361 = vmatmul.f32.gmra.mxu0 %v1969
    %v2362 = vpop.f32.mrf.mxu0
    %v2363 = vadd.f32 %v1989, %v2362
    %2364 = vmatmul.f32.gmra.mxu0 %v1970
    %v2365 = vpop.f32.mrf.mxu0
    %v2366 = vadd.f32 %v1989, %v2365
    %2367 = vdwg.mxu0
    %v2368 = vmax.f32 %v2009, %v2033
    %v2369 = vmax.f32 %v2012, %v2036
    %v2370 = vmax.f32 %v2015, %v2039
    %v2371 = vmax.f32 %v2018, %v2042
    %v2372 = vmax.f32 %v2021, %v2045
    %v2373 = vmax.f32 %v2024, %v2048
    %v2374 = vmax.f32 %v2027, %v2051
    %v2375 = vmax.f32 %v2030, %v2054
    %v2376 = vmax.f32 %v2368, %v2057
    %v2377 = vmax.f32 %v2369, %v2060
    %v2378 = vmax.f32 %v2370, %v2063
    %v2379 = vmax.f32 %v2371, %v2066
    %v2380 = vmax.f32 %v2372, %v2069
    %v2381 = vmax.f32 %v2373, %v2072
    %v2382 = vmax.f32 %v2374, %v2075
    %v2383 = vmax.f32 %v2375, %v2078
    %v2384 = vmax.f32 %v2376, %v2081
    %v2385 = vmax.f32 %v2377, %v2084
    %v2386 = vmax.f32 %v2378, %v2087
    %v2387 = vmax.f32 %v2379, %v2090
    %v2388 = vmax.f32 %v2380, %v2093
    %v2389 = vmax.f32 %v2381, %v2096
    %v2390 = vmax.f32 %v2382, %v2099
    %v2391 = vmax.f32 %v2383, %v2102
    %v2392 = vmax.f32 %v2384, %v2105
    %v2393 = vmax.f32 %v2385, %v2108
    %v2394 = vmax.f32 %v2386, %v2111
    %v2395 = vmax.f32 %v2387, %v2114
    %v2396 = vmax.f32 %v2388, %v2117
    %v2397 = vmax.f32 %v2389, %v2120
    %v2398 = vmax.f32 %v2390, %v2123
    %v2399 = vmax.f32 %v2391, %v2126
    %v2400 = vmax.f32 %v2392, %v2129
    %v2401 = vmax.f32 %v2393, %v2132
    %v2402 = vmax.f32 %v2394, %v2135
    %v2403 = vmax.f32 %v2395, %v2138
    %v2404 = vmax.f32 %v2396, %v2141
    %v2405 = vmax.f32 %v2397, %v2144
    %v2406 = vmax.f32 %v2398, %v2147
    %v2407 = vmax.f32 %v2399, %v2150
    %v2408 = vmax.f32 %v2400, %v2153
    %v2409 = vmax.f32 %v2401, %v2156
    %v2410 = vmax.f32 %v2402, %v2159
    %v2411 = vmax.f32 %v2403, %v2162
    %v2412 = vmax.f32 %v2404, %v2165
    %v2413 = vmax.f32 %v2405, %v2168
    %v2414 = vmax.f32 %v2406, %v2171
    %v2415 = vmax.f32 %v2407, %v2174
    %v2416 = vmax.f32 %v2408, %v2177
    %v2417 = vmax.f32 %v2409, %v2180
    %v2418 = vmax.f32 %v2410, %v2183
    %v2419 = vmax.f32 %v2411, %v2186
    %v2420 = vmax.f32 %v2412, %v2189
    %v2421 = vmax.f32 %v2413, %v2192
    %v2422 = vmax.f32 %v2414, %v2195
    %v2423 = vmax.f32 %v2415, %v2198
    %v2424 = vmax.f32 %v2416, %v2201
    %v2425 = vmax.f32 %v2417, %v2204
    %v2426 = vmax.f32 %v2418, %v2207
    %v2427 = vmax.f32 %v2419, %v2210
    %v2428 = vmax.f32 %v2420, %v2213
    %v2429 = vmax.f32 %v2421, %v2216
    %v2430 = vmax.f32 %v2422, %v2219
    %v2431 = vmax.f32 %v2423, %v2222
    %v2432 = vmax.f32 %v2424, %v2225
    %v2433 = vmax.f32 %v2425, %v2228
    %v2434 = vmax.f32 %v2426, %v2231
    %v2435 = vmax.f32 %v2427, %v2234
    %v2436 = vmax.f32 %v2428, %v2237
    %v2437 = vmax.f32 %v2429, %v2240
    %v2438 = vmax.f32 %v2430, %v2243
    %v2439 = vmax.f32 %v2431, %v2246
    %v2440 = vmax.f32 %v2432, %v2249
    %v2441 = vmax.f32 %v2433, %v2252
    %v2442 = vmax.f32 %v2434, %v2255
    %v2443 = vmax.f32 %v2435, %v2258
    %v2444 = vmax.f32 %v2436, %v2261
    %v2445 = vmax.f32 %v2437, %v2264
    %v2446 = vmax.f32 %v2438, %v2267
    %v2447 = vmax.f32 %v2439, %v2270
    %v2448 = vmax.f32 %v2440, %v2273
    %v2449 = vmax.f32 %v2441, %v2276
    %v2450 = vmax.f32 %v2442, %v2279
    %v2451 = vmax.f32 %v2443, %v2282
    %v2452 = vmax.f32 %v2444, %v2285
    %v2453 = vmax.f32 %v2445, %v2288
    %v2454 = vmax.f32 %v2446, %v2291
    %v2455 = vmax.f32 %v2447, %v2294
    %v2456 = vmax.f32 %v2448, %v2297
    %v2457 = vmax.f32 %v2449, %v2300
    %v2458 = vmax.f32 %v2450, %v2303
    %v2459 = vmax.f32 %v2451, %v2306
    %v2460 = vmax.f32 %v2452, %v2309
    %v2461 = vmax.f32 %v2453, %v2312
    %v2462 = vmax.f32 %v2454, %v2315
    %v2463 = vmax.f32 %v2455, %v2318
    %v2464 = vmax.f32 %v2456, %v2321
    %v2465 = vmax.f32 %v2457, %v2324
    %v2466 = vmax.f32 %v2458, %v2327
    %v2467 = vmax.f32 %v2459, %v2330
    %v2468 = vmax.f32 %v2460, %v2333
    %v2469 = vmax.f32 %v2461, %v2336
    %v2470 = vmax.f32 %v2462, %v2339
    %v2471 = vmax.f32 %v2463, %v2342
    %v2472 = vmax.f32 %v2464, %v2345
    %v2473 = vmax.f32 %v2465, %v2348
    %v2474 = vmax.f32 %v2466, %v2351
    %v2475 = vmax.f32 %v2467, %v2354
    %v2476 = vmax.f32 %v2468, %v2357
    %v2477 = vmax.f32 %v2469, %v2360
    %v2478 = vmax.f32 %v2470, %v2363
    %v2479 = vmax.f32 %v2471, %v2366
    %v2480 = vld [vmem:[%s1] sm:$0xff]
    %v2481 = vld [vmem:[%s1 + $0x8] sm:$0xff]
    %v2482 = vld [vmem:[%s1 + $0x10] sm:$0xff]
    %v2483 = vld [vmem:[%s1 + $0x18] sm:$0xff]
    %v2484 = vld [vmem:[%s1 + $0x20] sm:$0xff]
    %v2485 = vld [vmem:[%s1 + $0x28] sm:$0xff]
    %v2486 = vld [vmem:[%s1 + $0x30] sm:$0xff]
    %v2487 = vld [vmem:[%s1 + $0x38] sm:$0xff]
    %2489 = vset.pattern.permute.xlu0 0
    %2490 = vperm.xlu0 %2489, %v2480
    %v2491 = vpop.permute.xlu0 %2490
    %2494 = vset.pattern.permute.xlu0 0
    %2495 = vperm.xlu0 %2494, %v2481
    %v2496 = vpop.permute.xlu0 %2495
    %2499 = vset.pattern.permute.xlu0 0
    %2500 = vperm.xlu0 %2499, %v2482
    %v2501 = vpop.permute.xlu0 %2500
    %2504 = vset.pattern.permute.xlu0 0
    %2505 = vperm.xlu0 %2504, %v2483
    %v2506 = vpop.permute.xlu0 %2505
    %2509 = vset.pattern.permute.xlu0 0
    %2510 = vperm.xlu0 %2509, %v2484
    %v2511 = vpop.permute.xlu0 %2510
    %2514 = vset.pattern.permute.xlu0 0
    %2515 = vperm.xlu0 %2514, %v2485
    %v2516 = vpop.permute.xlu0 %2515
    %2519 = vset.pattern.permute.xlu0 0
    %2520 = vperm.xlu0 %2519, %v2486
    %v2521 = vpop.permute.xlu0 %2520
    %2524 = vset.pattern.permute.xlu0 0
    %2525 = vperm.xlu0 %2524, %v2487
    %v2526 = vpop.permute.xlu0 %2525
    %v2528 = vmul.f32 %v2472, %v2491
    %v2529 = vmul.f32 %v2473, %v2496
    %v2530 = vmul.f32 %v2474, %v2501
    %v2531 = vmul.f32 %v2475, %v2506
    %v2532 = vmul.f32 %v2476, %v2511
    %v2533 = vmul.f32 %v2477, %v2516
    %v2534 = vmul.f32 %v2478, %v2521
    %v2535 = vmul.f32 %v2479, %v2526
    %v2536 = vld [vmem:[%s5] sm:$0x1]
    %v2538 = vperm.slane %v2536, 0
    %v2540 = vmul.f32 %v2528, %v2538
    %v2541 = vmul.f32 %v2529, %v2538
    %v2542 = vmul.f32 %v2530, %v2538
    %v2543 = vmul.f32 %v2531, %v2538
    %v2544 = vmul.f32 %v2532, %v2538
    %v2545 = vmul.f32 %v2533, %v2538
    %v2546 = vmul.f32 %v2534, %v2538
    %v2547 = vmul.f32 %v2535, %v2538
    %v2548 = vld [vmem:[%s6] sm:$0x1]
    %v2550 = vperm.slane %v2548, 0
    %v2552 = vadd.f32 %v2540, %v2550
    %v2553 = vadd.f32 %v2541, %v2550
    %v2554 = vadd.f32 %v2542, %v2550
    %v2555 = vadd.f32 %v2543, %v2550
    %v2556 = vadd.f32 %v2544, %v2550
    %v2557 = vadd.f32 %v2545, %v2550
    %v2558 = vadd.f32 %v2546, %v2550
    %v2559 = vadd.f32 %v2547, %v2550
    %2560 = vst [vmem:[#allocation2] sm:$0xff] %v2552
    %2561 = vst [vmem:[#allocation2 + $0x8] sm:$0xff] %v2553
    %2562 = vst [vmem:[#allocation2 + $0x10] sm:$0xff] %v2554
    %2563 = vst [vmem:[#allocation2 + $0x18] sm:$0xff] %v2555
    %2564 = vst [vmem:[#allocation2 + $0x20] sm:$0xff] %v2556
    %2565 = vst [vmem:[#allocation2 + $0x28] sm:$0xff] %v2557
    %2566 = vst [vmem:[#allocation2 + $0x30] sm:$0xff] %v2558
    %2567 = vst [vmem:[#allocation2 + $0x38] sm:$0xff] %v2559
    // Predicated region
    $region30: #{tpu_custom_call.1} parent=1 // pred_check
      _
    $region31: #{tpu_custom_call.1} parent=1 // pred_check_branch
      %2569 = sbr.rel (0) target = $region33
    $region32: #{tpu_custom_call.1} parent=1 // pred_region
      %2571 = vsyncadd [#allocation3], 0
      %s2572 = sshll.u32 [#allocation2], 4
      %s2573 = int_to_ptr.vmem [resolvable:$true] %s2572
      %s2574 = sshll.u32 %s7, 4
      %s2575 = int_to_ptr.hbm [resolvable:$true] %s2574
      %2580 = dma.vmem_to_hbm [thread:$0]  %s2573, 1024, %s2575, [#allocation3], 128, 128, 8
    $region33: #{tpu_custom_call.1} parent=1 // pred_fallthru
      _
    // Predicated region
    $region34: #{tpu_custom_call.1} parent=1 // pred_check
      _
    $region35: #{tpu_custom_call.1} parent=1 // pred_check_branch
      %2582 = sbr.rel (0) target = $region37
    $region36: #{tpu_custom_call.1} parent=1 // pred_region
      %2584 = dma.done [#allocation3], 1024
    $region37: #{tpu_custom_call.1} parent=1 // pred_fallthru
      _
    %2585 = vsyncpa [#allocation3], 1

</llo_original>
